<compile_context>
chip_gen: v7x
topology: tpu7x:2x2x1
jax: 0.10.0
libtpu: 0.0.40
codegen_flags: <defaults>
</compile_context>

<pallas_src>
import math
from functools import partial

import jax
import jax.numpy as jnp
from jax import lax
from jax.experimental import pallas as pl
from jax.experimental.pallas import tpu as pltpu

# Layer widths: 7 -> 10 -> 8 -> 6 -> 3.
_DIMS = (7, 10, 8, 6, 3)


def _pack_offsets():
    """Flat offsets of [w1, b1, w2, b2, w3, b3, w4, b4] in one packed f32 array."""
    offs, off = [], 0
    for i in range(len(_DIMS) - 1):
        n_in, n_out = _DIMS[i], _DIMS[i + 1]
        offs.append((off, off + n_in * n_out))  # (weight_offset, bias_offset)
        off += n_in * n_out + n_out
    return tuple(offs), off


_OFFS, _WB_LEN = _pack_offsets()  # 243 scalars total (tiny; SMEM-resident across the grid)

_SUB = 8       # sublane rows per inner sub-slab: each f32 feature slab is exactly one vreg
_TS_MAX = 256  # max sublane rows per grid step (32768 samples, ~1.25 MiB in+out per block;
               # ~2.5 MiB double-buffered — far under even the 16 MiB v5e scoped-VMEM default)


def haptybot_kernel(wb_ref, x_ref, o_ref):
    """wb_ref: (243,) f32 SMEM  -- packed weights+biases, resident across the whole grid.
    x_ref : (7, TS, 128) f32 VMEM -- batch on sublane+lane axes, features on dim 0.
    o_ref : (3, TS, 128) f32 VMEM -- lane-dense softmax probabilities."""
    # Hoist all 243 SMEM scalar reads out of the sub-tile loop (once per grid step).
    wb = [wb_ref[i] for i in range(_WB_LEN)]

    n_sub = x_ref.shape[1] // _SUB  # static: block rows / sub-slab rows

    def sub_tile(t, carry):
        r0 = pl.multiple_of(t * _SUB, _SUB)
        # Per-feature activation slabs, each a full-density (_SUB, 128) vreg.
        h = [x_ref[k, pl.ds(r0, _SUB), :] for k in range(_DIMS[0])]

        # Three ReLU layers + linear head as unrolled scalar-broadcast FMAs on the VPU.
        for layer in range(4):
            n_in, n_out = _DIMS[layer], _DIMS[layer + 1]
            w_off, b_off = _OFFS[layer]
            new_h = []
            for j in range(n_out):
                acc = h[0] * wb[w_off + j]                       # w[0, j]
                for k in range(1, n_in):
                    acc = acc + h[k] * wb[w_off + k * n_out + j]  # w[k, j]
                acc = acc + wb[b_off + j]                        # bias[j]
                if layer < 3:
                    acc = jnp.maximum(acc, 0.0)
                new_h.append(acc)
            h = new_h

        # 3-way softmax: pairwise max/add (VPU), exact reciprocal so probs sum to 1 (f32).
        z0, z1, z2 = h
        m = jnp.maximum(jnp.maximum(z0, z1), z2)
        e0 = jnp.exp(z0 - m)
        e1 = jnp.exp(z1 - m)
        e2 = jnp.exp(z2 - m)
        inv = pl.reciprocal(e0 + e1 + e2)  # approx=False (exact)
        o_ref[0, pl.ds(r0, _SUB), :] = e0 * inv
        o_ref[1, pl.ds(r0, _SUB), :] = e1 * inv
        o_ref[2, pl.ds(r0, _SUB), :] = e2 * inv
        return carry

    # fori_loop (not a Python for) keeps vreg live ranges bounded per sub-slab.
    lax.fori_loop(0, n_sub, sub_tile, 0)


def pack_params(params):
    """Pack (w1,b1,...,w4,b4) into one flat (243,) f32 array (single SMEM operand).
    Call ONCE outside the per-inference path (perf review)."""
    return jnp.concatenate([p.reshape(-1).astype(jnp.float32) for p in params])


@partial(jax.jit, static_argnames=("ts",))
def _forward_tiled(wb, x_tiled, *, ts):
    rows = x_tiled.shape[1]
    return pl.pallas_call(
        haptybot_kernel,
        out_shape=jax.ShapeDtypeStruct((_DIMS[-1], rows, 128), jnp.float32),
        grid=(rows // ts,),
        in_specs=[
            # Packed weights/biases: whole array in SMEM, resident across all grid steps.
            pl.BlockSpec(memory_space=pltpu.MemorySpace.SMEM),
            # Activations: one (7, ts, 128) batch slab per grid step.
            pl.BlockSpec((_DIMS[0], ts, 128), lambda i: (0, i, 0)),
        ],
        out_specs=pl.BlockSpec((_DIMS[-1], ts, 128), lambda i: (0, i, 0)),
        compiler_params=pltpu.CompilerParams(
            dimension_semantics=("parallel",),  # v7x: shard batch grid over both TensorCores
        ),
    )(wb, x_tiled)


def _round_up(a, b):
    return ((a + b - 1) // b) * b


def choose_tile_rows(B):
    """Pick (total sublane rows, rows per grid step) for a batch of B samples."""
    rows = _round_up(max(1, -(-B // 128)), _SUB)
    ts = min(_TS_MAX, rows)
    rows = _round_up(rows, ts)
    return rows, ts


def haptybot_forward_tiled(wb, x_tiled, *, ts=None):
    """Preferred production contract (perf review): feature-major input (7, rows, 128)
    and output (3, rows, 128) -- no wrapper-side transpose passes."""
    rows = x_tiled.shape[1]
    if ts is None:
        ts = min(_TS_MAX, rows)
    assert rows % ts == 0 and ts % _SUB == 0
    return _forward_tiled(wb, x_tiled, ts=ts)


def to_tiled(x, rows):
    """(B, 7) f32 -> feature-major (7, rows, 128) f32 (zero-pads the batch)."""
    B = x.shape[0]
    xp = jnp.pad(x.astype(jnp.float32), ((0, rows * 128 - B), (0, 0)))
    return xp.T.reshape(_DIMS[0], rows, 128)


def from_tiled(out_tiled, B):
    """(3, rows, 128) -> (B, 3)."""
    rows = out_tiled.shape[1]
    return out_tiled.reshape(_DIMS[-1], rows * 128).T[:B]


def haptybot_forward(x, wb):
    """Compatibility path: x (B, 7) f32, packed wb (243,) -> (B, 3) softmax probs.
    NOTE (perf review): the transposes here are extra HBM passes at large B; prefer
    haptybot_forward_tiled with the feature-major layout as the external contract."""
    B = x.shape[0]
    rows, ts = choose_tile_rows(B)
    out_tiled = haptybot_forward_tiled(wb, to_tiled(x, rows), ts=ts)
    return from_tiled(out_tiled, B)


def init_params(key):
    """Deterministic init mimicking PyTorch nn.Linear default (uniform +/- 1/sqrt(fan_in)).
    Weights stored as (in, out); biases stored as (1, out)."""
    layer_dims = [(7, 10), (10, 8), (8, 6), (6, 3)]
    params = []
    for fan_in, fan_out in layer_dims:
        key, kw, kb = jax.random.split(key, 3)
        bound = 1.0 / math.sqrt(fan_in)
        w = jax.random.uniform(kw, (fan_in, fan_out), jnp.float32, -bound, bound)
        b = jax.random.uniform(kb, (1, fan_out), jnp.float32, -bound, bound)
        params.extend([w, b])
    return tuple(params)


def reference_forward(x, params):
    (w1, b1, w2, b2, w3, b3, w4, b4) = params
    hp = jax.lax.Precision.HIGHEST  # keep the reference in f32 (avoid default bf16 MXU)
    h = jnp.maximum(jnp.dot(x, w1, precision=hp) + b1, 0.0)
    h = jnp.maximum(jnp.dot(h, w2, precision=hp) + b2, 0.0)
    h = jnp.maximum(jnp.dot(h, w3, precision=hp) + b3, 0.0)
    return jax.nn.softmax(jnp.dot(h, w4, precision=hp) + b4, axis=-1)


# TODO(synk): only forward() is implemented as a kernel; move / remember / train_LT_memory /
# train_ST_memory are host-side RL control logic (replay memory, epsilon-greedy, optimizer
# steps) with no Pallas equivalent.

if __name__ == "__main__":
    key = jax.random.PRNGKey(0)
    key, kx = jax.random.split(key)

    B = 8                                                   # batch of 7-feature states
    x = jax.random.normal(kx, (B, 7), dtype=jnp.float32)
    params = init_params(key)

    wb = pack_params(params)  # packed once, outside the per-call path (perf review)

    out = haptybot_forward(x, wb)
    out = jax.block_until_ready(out)

    ref = reference_forward(x, params)
    assert out.shape == (B, 3)
    # Exact f32 path end-to-end -> tight tolerances.
    assert jnp.allclose(out, ref, atol=1e-4, rtol=1e-4), float(jnp.max(jnp.abs(out - ref)))
    assert jnp.allclose(jnp.sum(out, axis=-1), jnp.ones((B,)), atol=1e-4)

    print("KERNEL_OK")
</pallas_src>

<mosaic_0001>
module attributes {stable_mosaic.version = 11 : i64} {
  func.func @haptybot_kernel(%arg0: i32, %arg1: memref<243xf32, #tpu.memory_space<smem>>, %arg2: memref<7x8x128xf32, #tpu.memory_space<vmem>>, %arg3: memref<3x8x128xf32, #tpu.memory_space<vmem>>) attributes {dimension_semantics = [#tpu.dimension_semantics<parallel>], iteration_bounds = array<i64: 1>, scalar_prefetch = 0 : i64, scratch_operands = 0 : i64, tpu.core_type = #tpu.core_type<tc>, window_params = [{transform_indices = @transform_0, window_bounds = array<i64: 243>}, {transform_indices = @transform_1, window_bounds = array<i64: 7, 8, 128>}, {transform_indices = @transform_2, window_bounds = array<i64: 3, 8, 128>}]} {
    %c0 = arith.constant 0 : index
    %0 = memref.load %arg1[%c0] : memref<243xf32, #tpu.memory_space<smem>>
    %c1 = arith.constant 1 : index
    %1 = memref.load %arg1[%c1] : memref<243xf32, #tpu.memory_space<smem>>
    %c2 = arith.constant 2 : index
    %2 = memref.load %arg1[%c2] : memref<243xf32, #tpu.memory_space<smem>>
    %c3 = arith.constant 3 : index
    %3 = memref.load %arg1[%c3] : memref<243xf32, #tpu.memory_space<smem>>
    %c4 = arith.constant 4 : index
    %4 = memref.load %arg1[%c4] : memref<243xf32, #tpu.memory_space<smem>>
    %c5 = arith.constant 5 : index
    %5 = memref.load %arg1[%c5] : memref<243xf32, #tpu.memory_space<smem>>
    %c6 = arith.constant 6 : index
    %6 = memref.load %arg1[%c6] : memref<243xf32, #tpu.memory_space<smem>>
    %c7 = arith.constant 7 : index
    %7 = memref.load %arg1[%c7] : memref<243xf32, #tpu.memory_space<smem>>
    %c8 = arith.constant 8 : index
    %8 = memref.load %arg1[%c8] : memref<243xf32, #tpu.memory_space<smem>>
    %c9 = arith.constant 9 : index
    %9 = memref.load %arg1[%c9] : memref<243xf32, #tpu.memory_space<smem>>
    %c10 = arith.constant 10 : index
    %10 = memref.load %arg1[%c10] : memref<243xf32, #tpu.memory_space<smem>>
    %c11 = arith.constant 11 : index
    %11 = memref.load %arg1[%c11] : memref<243xf32, #tpu.memory_space<smem>>
    %c12 = arith.constant 12 : index
    %12 = memref.load %arg1[%c12] : memref<243xf32, #tpu.memory_space<smem>>
    %c13 = arith.constant 13 : index
    %13 = memref.load %arg1[%c13] : memref<243xf32, #tpu.memory_space<smem>>
    %c14 = arith.constant 14 : index
    %14 = memref.load %arg1[%c14] : memref<243xf32, #tpu.memory_space<smem>>
    %c15 = arith.constant 15 : index
    %15 = memref.load %arg1[%c15] : memref<243xf32, #tpu.memory_space<smem>>
    %c16 = arith.constant 16 : index
    %16 = memref.load %arg1[%c16] : memref<243xf32, #tpu.memory_space<smem>>
    %c17 = arith.constant 17 : index
    %17 = memref.load %arg1[%c17] : memref<243xf32, #tpu.memory_space<smem>>
    %c18 = arith.constant 18 : index
    %18 = memref.load %arg1[%c18] : memref<243xf32, #tpu.memory_space<smem>>
    %c19 = arith.constant 19 : index
    %19 = memref.load %arg1[%c19] : memref<243xf32, #tpu.memory_space<smem>>
    %c20 = arith.constant 20 : index
    %20 = memref.load %arg1[%c20] : memref<243xf32, #tpu.memory_space<smem>>
    %c21 = arith.constant 21 : index
    %21 = memref.load %arg1[%c21] : memref<243xf32, #tpu.memory_space<smem>>
    %c22 = arith.constant 22 : index
    %22 = memref.load %arg1[%c22] : memref<243xf32, #tpu.memory_space<smem>>
    %c23 = arith.constant 23 : index
    %23 = memref.load %arg1[%c23] : memref<243xf32, #tpu.memory_space<smem>>
    %c24 = arith.constant 24 : index
    %24 = memref.load %arg1[%c24] : memref<243xf32, #tpu.memory_space<smem>>
    %c25 = arith.constant 25 : index
    %25 = memref.load %arg1[%c25] : memref<243xf32, #tpu.memory_space<smem>>
    %c26 = arith.constant 26 : index
    %26 = memref.load %arg1[%c26] : memref<243xf32, #tpu.memory_space<smem>>
    %c27 = arith.constant 27 : index
    %27 = memref.load %arg1[%c27] : memref<243xf32, #tpu.memory_space<smem>>
    %c28 = arith.constant 28 : index
    %28 = memref.load %arg1[%c28] : memref<243xf32, #tpu.memory_space<smem>>
    %c29 = arith.constant 29 : index
    %29 = memref.load %arg1[%c29] : memref<243xf32, #tpu.memory_space<smem>>
    %c30 = arith.constant 30 : index
    %30 = memref.load %arg1[%c30] : memref<243xf32, #tpu.memory_space<smem>>
    %c31 = arith.constant 31 : index
    %31 = memref.load %arg1[%c31] : memref<243xf32, #tpu.memory_space<smem>>
    %c32 = arith.constant 32 : index
    %32 = memref.load %arg1[%c32] : memref<243xf32, #tpu.memory_space<smem>>
    %c33 = arith.constant 33 : index
    %33 = memref.load %arg1[%c33] : memref<243xf32, #tpu.memory_space<smem>>
    %c34 = arith.constant 34 : index
    %34 = memref.load %arg1[%c34] : memref<243xf32, #tpu.memory_space<smem>>
    %c35 = arith.constant 35 : index
    %35 = memref.load %arg1[%c35] : memref<243xf32, #tpu.memory_space<smem>>
    %c36 = arith.constant 36 : index
    %36 = memref.load %arg1[%c36] : memref<243xf32, #tpu.memory_space<smem>>
    %c37 = arith.constant 37 : index
    %37 = memref.load %arg1[%c37] : memref<243xf32, #tpu.memory_space<smem>>
    %c38 = arith.constant 38 : index
    %38 = memref.load %arg1[%c38] : memref<243xf32, #tpu.memory_space<smem>>
    %c39 = arith.constant 39 : index
    %39 = memref.load %arg1[%c39] : memref<243xf32, #tpu.memory_space<smem>>
    %c40 = arith.constant 40 : index
    %40 = memref.load %arg1[%c40] : memref<243xf32, #tpu.memory_space<smem>>
    %c41 = arith.constant 41 : index
    %41 = memref.load %arg1[%c41] : memref<243xf32, #tpu.memory_space<smem>>
    %c42 = arith.constant 42 : index
    %42 = memref.load %arg1[%c42] : memref<243xf32, #tpu.memory_space<smem>>
    %c43 = arith.constant 43 : index
    %43 = memref.load %arg1[%c43] : memref<243xf32, #tpu.memory_space<smem>>
    %c44 = arith.constant 44 : index
    %44 = memref.load %arg1[%c44] : memref<243xf32, #tpu.memory_space<smem>>
    %c45 = arith.constant 45 : index
    %45 = memref.load %arg1[%c45] : memref<243xf32, #tpu.memory_space<smem>>
    %c46 = arith.constant 46 : index
    %46 = memref.load %arg1[%c46] : memref<243xf32, #tpu.memory_space<smem>>
    %c47 = arith.constant 47 : index
    %47 = memref.load %arg1[%c47] : memref<243xf32, #tpu.memory_space<smem>>
    %c48 = arith.constant 48 : index
    %48 = memref.load %arg1[%c48] : memref<243xf32, #tpu.memory_space<smem>>
    %c49 = arith.constant 49 : index
    %49 = memref.load %arg1[%c49] : memref<243xf32, #tpu.memory_space<smem>>
    %c50 = arith.constant 50 : index
    %50 = memref.load %arg1[%c50] : memref<243xf32, #tpu.memory_space<smem>>
    %c51 = arith.constant 51 : index
    %51 = memref.load %arg1[%c51] : memref<243xf32, #tpu.memory_space<smem>>
    %c52 = arith.constant 52 : index
    %52 = memref.load %arg1[%c52] : memref<243xf32, #tpu.memory_space<smem>>
    %c53 = arith.constant 53 : index
    %53 = memref.load %arg1[%c53] : memref<243xf32, #tpu.memory_space<smem>>
    %c54 = arith.constant 54 : index
    %54 = memref.load %arg1[%c54] : memref<243xf32, #tpu.memory_space<smem>>
    %c55 = arith.constant 55 : index
    %55 = memref.load %arg1[%c55] : memref<243xf32, #tpu.memory_space<smem>>
    %c56 = arith.constant 56 : index
    %56 = memref.load %arg1[%c56] : memref<243xf32, #tpu.memory_space<smem>>
    %c57 = arith.constant 57 : index
    %57 = memref.load %arg1[%c57] : memref<243xf32, #tpu.memory_space<smem>>
    %c58 = arith.constant 58 : index
    %58 = memref.load %arg1[%c58] : memref<243xf32, #tpu.memory_space<smem>>
    %c59 = arith.constant 59 : index
    %59 = memref.load %arg1[%c59] : memref<243xf32, #tpu.memory_space<smem>>
    %c60 = arith.constant 60 : index
    %60 = memref.load %arg1[%c60] : memref<243xf32, #tpu.memory_space<smem>>
    %c61 = arith.constant 61 : index
    %61 = memref.load %arg1[%c61] : memref<243xf32, #tpu.memory_space<smem>>
    %c62 = arith.constant 62 : index
    %62 = memref.load %arg1[%c62] : memref<243xf32, #tpu.memory_space<smem>>
    %c63 = arith.constant 63 : index
    %63 = memref.load %arg1[%c63] : memref<243xf32, #tpu.memory_space<smem>>
    %c64 = arith.constant 64 : index
    %64 = memref.load %arg1[%c64] : memref<243xf32, #tpu.memory_space<smem>>
    %c65 = arith.constant 65 : index
    %65 = memref.load %arg1[%c65] : memref<243xf32, #tpu.memory_space<smem>>
    %c66 = arith.constant 66 : index
    %66 = memref.load %arg1[%c66] : memref<243xf32, #tpu.memory_space<smem>>
    %c67 = arith.constant 67 : index
    %67 = memref.load %arg1[%c67] : memref<243xf32, #tpu.memory_space<smem>>
    %c68 = arith.constant 68 : index
    %68 = memref.load %arg1[%c68] : memref<243xf32, #tpu.memory_space<smem>>
    %c69 = arith.constant 69 : index
    %69 = memref.load %arg1[%c69] : memref<243xf32, #tpu.memory_space<smem>>
    %c70 = arith.constant 70 : index
    %70 = memref.load %arg1[%c70] : memref<243xf32, #tpu.memory_space<smem>>
    %c71 = arith.constant 71 : index
    %71 = memref.load %arg1[%c71] : memref<243xf32, #tpu.memory_space<smem>>
    %c72 = arith.constant 72 : index
    %72 = memref.load %arg1[%c72] : memref<243xf32, #tpu.memory_space<smem>>
    %c73 = arith.constant 73 : index
    %73 = memref.load %arg1[%c73] : memref<243xf32, #tpu.memory_space<smem>>
    %c74 = arith.constant 74 : index
    %74 = memref.load %arg1[%c74] : memref<243xf32, #tpu.memory_space<smem>>
    %c75 = arith.constant 75 : index
    %75 = memref.load %arg1[%c75] : memref<243xf32, #tpu.memory_space<smem>>
    %c76 = arith.constant 76 : index
    %76 = memref.load %arg1[%c76] : memref<243xf32, #tpu.memory_space<smem>>
    %c77 = arith.constant 77 : index
    %77 = memref.load %arg1[%c77] : memref<243xf32, #tpu.memory_space<smem>>
    %c78 = arith.constant 78 : index
    %78 = memref.load %arg1[%c78] : memref<243xf32, #tpu.memory_space<smem>>
    %c79 = arith.constant 79 : index
    %79 = memref.load %arg1[%c79] : memref<243xf32, #tpu.memory_space<smem>>
    %c80 = arith.constant 80 : index
    %80 = memref.load %arg1[%c80] : memref<243xf32, #tpu.memory_space<smem>>
    %c81 = arith.constant 81 : index
    %81 = memref.load %arg1[%c81] : memref<243xf32, #tpu.memory_space<smem>>
    %c82 = arith.constant 82 : index
    %82 = memref.load %arg1[%c82] : memref<243xf32, #tpu.memory_space<smem>>
    %c83 = arith.constant 83 : index
    %83 = memref.load %arg1[%c83] : memref<243xf32, #tpu.memory_space<smem>>
    %c84 = arith.constant 84 : index
    %84 = memref.load %arg1[%c84] : memref<243xf32, #tpu.memory_space<smem>>
    %c85 = arith.constant 85 : index
    %85 = memref.load %arg1[%c85] : memref<243xf32, #tpu.memory_space<smem>>
    %c86 = arith.constant 86 : index
    %86 = memref.load %arg1[%c86] : memref<243xf32, #tpu.memory_space<smem>>
    %c87 = arith.constant 87 : index
    %87 = memref.load %arg1[%c87] : memref<243xf32, #tpu.memory_space<smem>>
    %c88 = arith.constant 88 : index
    %88 = memref.load %arg1[%c88] : memref<243xf32, #tpu.memory_space<smem>>
    %c89 = arith.constant 89 : index
    %89 = memref.load %arg1[%c89] : memref<243xf32, #tpu.memory_space<smem>>
    %c90 = arith.constant 90 : index
    %90 = memref.load %arg1[%c90] : memref<243xf32, #tpu.memory_space<smem>>
    %c91 = arith.constant 91 : index
    %91 = memref.load %arg1[%c91] : memref<243xf32, #tpu.memory_space<smem>>
    %c92 = arith.constant 92 : index
    %92 = memref.load %arg1[%c92] : memref<243xf32, #tpu.memory_space<smem>>
    %c93 = arith.constant 93 : index
    %93 = memref.load %arg1[%c93] : memref<243xf32, #tpu.memory_space<smem>>
    %c94 = arith.constant 94 : index
    %94 = memref.load %arg1[%c94] : memref<243xf32, #tpu.memory_space<smem>>
    %c95 = arith.constant 95 : index
    %95 = memref.load %arg1[%c95] : memref<243xf32, #tpu.memory_space<smem>>
    %c96 = arith.constant 96 : index
    %96 = memref.load %arg1[%c96] : memref<243xf32, #tpu.memory_space<smem>>
    %c97 = arith.constant 97 : index
    %97 = memref.load %arg1[%c97] : memref<243xf32, #tpu.memory_space<smem>>
    %c98 = arith.constant 98 : index
    %98 = memref.load %arg1[%c98] : memref<243xf32, #tpu.memory_space<smem>>
    %c99 = arith.constant 99 : index
    %99 = memref.load %arg1[%c99] : memref<243xf32, #tpu.memory_space<smem>>
    %c100 = arith.constant 100 : index
    %100 = memref.load %arg1[%c100] : memref<243xf32, #tpu.memory_space<smem>>
    %c101 = arith.constant 101 : index
    %101 = memref.load %arg1[%c101] : memref<243xf32, #tpu.memory_space<smem>>
    %c102 = arith.constant 102 : index
    %102 = memref.load %arg1[%c102] : memref<243xf32, #tpu.memory_space<smem>>
    %c103 = arith.constant 103 : index
    %103 = memref.load %arg1[%c103] : memref<243xf32, #tpu.memory_space<smem>>
    %c104 = arith.constant 104 : index
    %104 = memref.load %arg1[%c104] : memref<243xf32, #tpu.memory_space<smem>>
    %c105 = arith.constant 105 : index
    %105 = memref.load %arg1[%c105] : memref<243xf32, #tpu.memory_space<smem>>
    %c106 = arith.constant 106 : index
    %106 = memref.load %arg1[%c106] : memref<243xf32, #tpu.memory_space<smem>>
    %c107 = arith.constant 107 : index
    %107 = memref.load %arg1[%c107] : memref<243xf32, #tpu.memory_space<smem>>
    %c108 = arith.constant 108 : index
    %108 = memref.load %arg1[%c108] : memref<243xf32, #tpu.memory_space<smem>>
    %c109 = arith.constant 109 : index
    %109 = memref.load %arg1[%c109] : memref<243xf32, #tpu.memory_space<smem>>
    %c110 = arith.constant 110 : index
    %110 = memref.load %arg1[%c110] : memref<243xf32, #tpu.memory_space<smem>>
    %c111 = arith.constant 111 : index
    %111 = memref.load %arg1[%c111] : memref<243xf32, #tpu.memory_space<smem>>
    %c112 = arith.constant 112 : index
    %112 = memref.load %arg1[%c112] : memref<243xf32, #tpu.memory_space<smem>>
    %c113 = arith.constant 113 : index
    %113 = memref.load %arg1[%c113] : memref<243xf32, #tpu.memory_space<smem>>
    %c114 = arith.constant 114 : index
    %114 = memref.load %arg1[%c114] : memref<243xf32, #tpu.memory_space<smem>>
    %c115 = arith.constant 115 : index
    %115 = memref.load %arg1[%c115] : memref<243xf32, #tpu.memory_space<smem>>
    %c116 = arith.constant 116 : index
    %116 = memref.load %arg1[%c116] : memref<243xf32, #tpu.memory_space<smem>>
    %c117 = arith.constant 117 : index
    %117 = memref.load %arg1[%c117] : memref<243xf32, #tpu.memory_space<smem>>
    %c118 = arith.constant 118 : index
    %118 = memref.load %arg1[%c118] : memref<243xf32, #tpu.memory_space<smem>>
    %c119 = arith.constant 119 : index
    %119 = memref.load %arg1[%c119] : memref<243xf32, #tpu.memory_space<smem>>
    %c120 = arith.constant 120 : index
    %120 = memref.load %arg1[%c120] : memref<243xf32, #tpu.memory_space<smem>>
    %c121 = arith.constant 121 : index
    %121 = memref.load %arg1[%c121] : memref<243xf32, #tpu.memory_space<smem>>
    %c122 = arith.constant 122 : index
    %122 = memref.load %arg1[%c122] : memref<243xf32, #tpu.memory_space<smem>>
    %c123 = arith.constant 123 : index
    %123 = memref.load %arg1[%c123] : memref<243xf32, #tpu.memory_space<smem>>
    %c124 = arith.constant 124 : index
    %124 = memref.load %arg1[%c124] : memref<243xf32, #tpu.memory_space<smem>>
    %c125 = arith.constant 125 : index
    %125 = memref.load %arg1[%c125] : memref<243xf32, #tpu.memory_space<smem>>
    %c126 = arith.constant 126 : index
    %126 = memref.load %arg1[%c126] : memref<243xf32, #tpu.memory_space<smem>>
    %c127 = arith.constant 127 : index
    %127 = memref.load %arg1[%c127] : memref<243xf32, #tpu.memory_space<smem>>
    %c128 = arith.constant 128 : index
    %128 = memref.load %arg1[%c128] : memref<243xf32, #tpu.memory_space<smem>>
    %c129 = arith.constant 129 : index
    %129 = memref.load %arg1[%c129] : memref<243xf32, #tpu.memory_space<smem>>
    %c130 = arith.constant 130 : index
    %130 = memref.load %arg1[%c130] : memref<243xf32, #tpu.memory_space<smem>>
    %c131 = arith.constant 131 : index
    %131 = memref.load %arg1[%c131] : memref<243xf32, #tpu.memory_space<smem>>
    %c132 = arith.constant 132 : index
    %132 = memref.load %arg1[%c132] : memref<243xf32, #tpu.memory_space<smem>>
    %c133 = arith.constant 133 : index
    %133 = memref.load %arg1[%c133] : memref<243xf32, #tpu.memory_space<smem>>
    %c134 = arith.constant 134 : index
    %134 = memref.load %arg1[%c134] : memref<243xf32, #tpu.memory_space<smem>>
    %c135 = arith.constant 135 : index
    %135 = memref.load %arg1[%c135] : memref<243xf32, #tpu.memory_space<smem>>
    %c136 = arith.constant 136 : index
    %136 = memref.load %arg1[%c136] : memref<243xf32, #tpu.memory_space<smem>>
    %c137 = arith.constant 137 : index
    %137 = memref.load %arg1[%c137] : memref<243xf32, #tpu.memory_space<smem>>
    %c138 = arith.constant 138 : index
    %138 = memref.load %arg1[%c138] : memref<243xf32, #tpu.memory_space<smem>>
    %c139 = arith.constant 139 : index
    %139 = memref.load %arg1[%c139] : memref<243xf32, #tpu.memory_space<smem>>
    %c140 = arith.constant 140 : index
    %140 = memref.load %arg1[%c140] : memref<243xf32, #tpu.memory_space<smem>>
    %c141 = arith.constant 141 : index
    %141 = memref.load %arg1[%c141] : memref<243xf32, #tpu.memory_space<smem>>
    %c142 = arith.constant 142 : index
    %142 = memref.load %arg1[%c142] : memref<243xf32, #tpu.memory_space<smem>>
    %c143 = arith.constant 143 : index
    %143 = memref.load %arg1[%c143] : memref<243xf32, #tpu.memory_space<smem>>
    %c144 = arith.constant 144 : index
    %144 = memref.load %arg1[%c144] : memref<243xf32, #tpu.memory_space<smem>>
    %c145 = arith.constant 145 : index
    %145 = memref.load %arg1[%c145] : memref<243xf32, #tpu.memory_space<smem>>
    %c146 = arith.constant 146 : index
    %146 = memref.load %arg1[%c146] : memref<243xf32, #tpu.memory_space<smem>>
    %c147 = arith.constant 147 : index
    %147 = memref.load %arg1[%c147] : memref<243xf32, #tpu.memory_space<smem>>
    %c148 = arith.constant 148 : index
    %148 = memref.load %arg1[%c148] : memref<243xf32, #tpu.memory_space<smem>>
    %c149 = arith.constant 149 : index
    %149 = memref.load %arg1[%c149] : memref<243xf32, #tpu.memory_space<smem>>
    %c150 = arith.constant 150 : index
    %150 = memref.load %arg1[%c150] : memref<243xf32, #tpu.memory_space<smem>>
    %c151 = arith.constant 151 : index
    %151 = memref.load %arg1[%c151] : memref<243xf32, #tpu.memory_space<smem>>
    %c152 = arith.constant 152 : index
    %152 = memref.load %arg1[%c152] : memref<243xf32, #tpu.memory_space<smem>>
    %c153 = arith.constant 153 : index
    %153 = memref.load %arg1[%c153] : memref<243xf32, #tpu.memory_space<smem>>
    %c154 = arith.constant 154 : index
    %154 = memref.load %arg1[%c154] : memref<243xf32, #tpu.memory_space<smem>>
    %c155 = arith.constant 155 : index
    %155 = memref.load %arg1[%c155] : memref<243xf32, #tpu.memory_space<smem>>
    %c156 = arith.constant 156 : index
    %156 = memref.load %arg1[%c156] : memref<243xf32, #tpu.memory_space<smem>>
    %c157 = arith.constant 157 : index
    %157 = memref.load %arg1[%c157] : memref<243xf32, #tpu.memory_space<smem>>
    %c158 = arith.constant 158 : index
    %158 = memref.load %arg1[%c158] : memref<243xf32, #tpu.memory_space<smem>>
    %c159 = arith.constant 159 : index
    %159 = memref.load %arg1[%c159] : memref<243xf32, #tpu.memory_space<smem>>
    %c160 = arith.constant 160 : index
    %160 = memref.load %arg1[%c160] : memref<243xf32, #tpu.memory_space<smem>>
    %c161 = arith.constant 161 : index
    %161 = memref.load %arg1[%c161] : memref<243xf32, #tpu.memory_space<smem>>
    %c162 = arith.constant 162 : index
    %162 = memref.load %arg1[%c162] : memref<243xf32, #tpu.memory_space<smem>>
    %c163 = arith.constant 163 : index
    %163 = memref.load %arg1[%c163] : memref<243xf32, #tpu.memory_space<smem>>
    %c164 = arith.constant 164 : index
    %164 = memref.load %arg1[%c164] : memref<243xf32, #tpu.memory_space<smem>>
    %c165 = arith.constant 165 : index
    %165 = memref.load %arg1[%c165] : memref<243xf32, #tpu.memory_space<smem>>
    %c166 = arith.constant 166 : index
    %166 = memref.load %arg1[%c166] : memref<243xf32, #tpu.memory_space<smem>>
    %c167 = arith.constant 167 : index
    %167 = memref.load %arg1[%c167] : memref<243xf32, #tpu.memory_space<smem>>
    %c168 = arith.constant 168 : index
    %168 = memref.load %arg1[%c168] : memref<243xf32, #tpu.memory_space<smem>>
    %c169 = arith.constant 169 : index
    %169 = memref.load %arg1[%c169] : memref<243xf32, #tpu.memory_space<smem>>
    %c170 = arith.constant 170 : index
    %170 = memref.load %arg1[%c170] : memref<243xf32, #tpu.memory_space<smem>>
    %c171 = arith.constant 171 : index
    %171 = memref.load %arg1[%c171] : memref<243xf32, #tpu.memory_space<smem>>
    %c172 = arith.constant 172 : index
    %172 = memref.load %arg1[%c172] : memref<243xf32, #tpu.memory_space<smem>>
    %c173 = arith.constant 173 : index
    %173 = memref.load %arg1[%c173] : memref<243xf32, #tpu.memory_space<smem>>
    %c174 = arith.constant 174 : index
    %174 = memref.load %arg1[%c174] : memref<243xf32, #tpu.memory_space<smem>>
    %c175 = arith.constant 175 : index
    %175 = memref.load %arg1[%c175] : memref<243xf32, #tpu.memory_space<smem>>
    %c176 = arith.constant 176 : index
    %176 = memref.load %arg1[%c176] : memref<243xf32, #tpu.memory_space<smem>>
    %c177 = arith.constant 177 : index
    %177 = memref.load %arg1[%c177] : memref<243xf32, #tpu.memory_space<smem>>
    %c178 = arith.constant 178 : index
    %178 = memref.load %arg1[%c178] : memref<243xf32, #tpu.memory_space<smem>>
    %c179 = arith.constant 179 : index
    %179 = memref.load %arg1[%c179] : memref<243xf32, #tpu.memory_space<smem>>
    %c180 = arith.constant 180 : index
    %180 = memref.load %arg1[%c180] : memref<243xf32, #tpu.memory_space<smem>>
    %c181 = arith.constant 181 : index
    %181 = memref.load %arg1[%c181] : memref<243xf32, #tpu.memory_space<smem>>
    %c182 = arith.constant 182 : index
    %182 = memref.load %arg1[%c182] : memref<243xf32, #tpu.memory_space<smem>>
    %c183 = arith.constant 183 : index
    %183 = memref.load %arg1[%c183] : memref<243xf32, #tpu.memory_space<smem>>
    %c184 = arith.constant 184 : index
    %184 = memref.load %arg1[%c184] : memref<243xf32, #tpu.memory_space<smem>>
    %c185 = arith.constant 185 : index
    %185 = memref.load %arg1[%c185] : memref<243xf32, #tpu.memory_space<smem>>
    %c186 = arith.constant 186 : index
    %186 = memref.load %arg1[%c186] : memref<243xf32, #tpu.memory_space<smem>>
    %c187 = arith.constant 187 : index
    %187 = memref.load %arg1[%c187] : memref<243xf32, #tpu.memory_space<smem>>
    %c188 = arith.constant 188 : index
    %188 = memref.load %arg1[%c188] : memref<243xf32, #tpu.memory_space<smem>>
    %c189 = arith.constant 189 : index
    %189 = memref.load %arg1[%c189] : memref<243xf32, #tpu.memory_space<smem>>
    %c190 = arith.constant 190 : index
    %190 = memref.load %arg1[%c190] : memref<243xf32, #tpu.memory_space<smem>>
    %c191 = arith.constant 191 : index
    %191 = memref.load %arg1[%c191] : memref<243xf32, #tpu.memory_space<smem>>
    %c192 = arith.constant 192 : index
    %192 = memref.load %arg1[%c192] : memref<243xf32, #tpu.memory_space<smem>>
    %c193 = arith.constant 193 : index
    %193 = memref.load %arg1[%c193] : memref<243xf32, #tpu.memory_space<smem>>
    %c194 = arith.constant 194 : index
    %194 = memref.load %arg1[%c194] : memref<243xf32, #tpu.memory_space<smem>>
    %c195 = arith.constant 195 : index
    %195 = memref.load %arg1[%c195] : memref<243xf32, #tpu.memory_space<smem>>
    %c196 = arith.constant 196 : index
    %196 = memref.load %arg1[%c196] : memref<243xf32, #tpu.memory_space<smem>>
    %c197 = arith.constant 197 : index
    %197 = memref.load %arg1[%c197] : memref<243xf32, #tpu.memory_space<smem>>
    %c198 = arith.constant 198 : index
    %198 = memref.load %arg1[%c198] : memref<243xf32, #tpu.memory_space<smem>>
    %c199 = arith.constant 199 : index
    %199 = memref.load %arg1[%c199] : memref<243xf32, #tpu.memory_space<smem>>
    %c200 = arith.constant 200 : index
    %200 = memref.load %arg1[%c200] : memref<243xf32, #tpu.memory_space<smem>>
    %c201 = arith.constant 201 : index
    %201 = memref.load %arg1[%c201] : memref<243xf32, #tpu.memory_space<smem>>
    %c202 = arith.constant 202 : index
    %202 = memref.load %arg1[%c202] : memref<243xf32, #tpu.memory_space<smem>>
    %c203 = arith.constant 203 : index
    %203 = memref.load %arg1[%c203] : memref<243xf32, #tpu.memory_space<smem>>
    %c204 = arith.constant 204 : index
    %204 = memref.load %arg1[%c204] : memref<243xf32, #tpu.memory_space<smem>>
    %c205 = arith.constant 205 : index
    %205 = memref.load %arg1[%c205] : memref<243xf32, #tpu.memory_space<smem>>
    %c206 = arith.constant 206 : index
    %206 = memref.load %arg1[%c206] : memref<243xf32, #tpu.memory_space<smem>>
    %c207 = arith.constant 207 : index
    %207 = memref.load %arg1[%c207] : memref<243xf32, #tpu.memory_space<smem>>
    %c208 = arith.constant 208 : index
    %208 = memref.load %arg1[%c208] : memref<243xf32, #tpu.memory_space<smem>>
    %c209 = arith.constant 209 : index
    %209 = memref.load %arg1[%c209] : memref<243xf32, #tpu.memory_space<smem>>
    %c210 = arith.constant 210 : index
    %210 = memref.load %arg1[%c210] : memref<243xf32, #tpu.memory_space<smem>>
    %c211 = arith.constant 211 : index
    %211 = memref.load %arg1[%c211] : memref<243xf32, #tpu.memory_space<smem>>
    %c212 = arith.constant 212 : index
    %212 = memref.load %arg1[%c212] : memref<243xf32, #tpu.memory_space<smem>>
    %c213 = arith.constant 213 : index
    %213 = memref.load %arg1[%c213] : memref<243xf32, #tpu.memory_space<smem>>
    %c214 = arith.constant 214 : index
    %214 = memref.load %arg1[%c214] : memref<243xf32, #tpu.memory_space<smem>>
    %c215 = arith.constant 215 : index
    %215 = memref.load %arg1[%c215] : memref<243xf32, #tpu.memory_space<smem>>
    %c216 = arith.constant 216 : index
    %216 = memref.load %arg1[%c216] : memref<243xf32, #tpu.memory_space<smem>>
    %c217 = arith.constant 217 : index
    %217 = memref.load %arg1[%c217] : memref<243xf32, #tpu.memory_space<smem>>
    %c218 = arith.constant 218 : index
    %218 = memref.load %arg1[%c218] : memref<243xf32, #tpu.memory_space<smem>>
    %c219 = arith.constant 219 : index
    %219 = memref.load %arg1[%c219] : memref<243xf32, #tpu.memory_space<smem>>
    %c220 = arith.constant 220 : index
    %220 = memref.load %arg1[%c220] : memref<243xf32, #tpu.memory_space<smem>>
    %c221 = arith.constant 221 : index
    %221 = memref.load %arg1[%c221] : memref<243xf32, #tpu.memory_space<smem>>
    %c222 = arith.constant 222 : index
    %222 = memref.load %arg1[%c222] : memref<243xf32, #tpu.memory_space<smem>>
    %c223 = arith.constant 223 : index
    %223 = memref.load %arg1[%c223] : memref<243xf32, #tpu.memory_space<smem>>
    %c224 = arith.constant 224 : index
    %224 = memref.load %arg1[%c224] : memref<243xf32, #tpu.memory_space<smem>>
    %c225 = arith.constant 225 : index
    %225 = memref.load %arg1[%c225] : memref<243xf32, #tpu.memory_space<smem>>
    %c226 = arith.constant 226 : index
    %226 = memref.load %arg1[%c226] : memref<243xf32, #tpu.memory_space<smem>>
    %c227 = arith.constant 227 : index
    %227 = memref.load %arg1[%c227] : memref<243xf32, #tpu.memory_space<smem>>
    %c228 = arith.constant 228 : index
    %228 = memref.load %arg1[%c228] : memref<243xf32, #tpu.memory_space<smem>>
    %c229 = arith.constant 229 : index
    %229 = memref.load %arg1[%c229] : memref<243xf32, #tpu.memory_space<smem>>
    %c230 = arith.constant 230 : index
    %230 = memref.load %arg1[%c230] : memref<243xf32, #tpu.memory_space<smem>>
    %c231 = arith.constant 231 : index
    %231 = memref.load %arg1[%c231] : memref<243xf32, #tpu.memory_space<smem>>
    %c232 = arith.constant 232 : index
    %232 = memref.load %arg1[%c232] : memref<243xf32, #tpu.memory_space<smem>>
    %c233 = arith.constant 233 : index
    %233 = memref.load %arg1[%c233] : memref<243xf32, #tpu.memory_space<smem>>
    %c234 = arith.constant 234 : index
    %234 = memref.load %arg1[%c234] : memref<243xf32, #tpu.memory_space<smem>>
    %c235 = arith.constant 235 : index
    %235 = memref.load %arg1[%c235] : memref<243xf32, #tpu.memory_space<smem>>
    %c236 = arith.constant 236 : index
    %236 = memref.load %arg1[%c236] : memref<243xf32, #tpu.memory_space<smem>>
    %c237 = arith.constant 237 : index
    %237 = memref.load %arg1[%c237] : memref<243xf32, #tpu.memory_space<smem>>
    %c238 = arith.constant 238 : index
    %238 = memref.load %arg1[%c238] : memref<243xf32, #tpu.memory_space<smem>>
    %c239 = arith.constant 239 : index
    %239 = memref.load %arg1[%c239] : memref<243xf32, #tpu.memory_space<smem>>
    %c240 = arith.constant 240 : index
    %240 = memref.load %arg1[%c240] : memref<243xf32, #tpu.memory_space<smem>>
    %c241 = arith.constant 241 : index
    %241 = memref.load %arg1[%c241] : memref<243xf32, #tpu.memory_space<smem>>
    %c242 = arith.constant 242 : index
    %242 = memref.load %arg1[%c242] : memref<243xf32, #tpu.memory_space<smem>>
    %c0_i32 = arith.constant 0 : i32
    %c8_i32 = arith.constant 8 : i32
    %243 = arith.muli %c0_i32, %c8_i32 : i32
    %244 = tpu.assume_multiple %243, 8 : i32
    %c0_0 = arith.constant 0 : index
    %245 = arith.index_cast %244 : i32 to index
    %c0_1 = arith.constant 0 : index
    %246 = vector.load %arg2[%c0_0, %245, %c0_1] : memref<7x8x128xf32, #tpu.memory_space<vmem>>, vector<1x8x128xf32>
    %247 = vector.shape_cast %246 : vector<1x8x128xf32> to vector<8x128xf32>
    %c1_2 = arith.constant 1 : index
    %248 = arith.index_cast %244 : i32 to index
    %c0_3 = arith.constant 0 : index
    %249 = vector.load %arg2[%c1_2, %248, %c0_3] : memref<7x8x128xf32, #tpu.memory_space<vmem>>, vector<1x8x128xf32>
    %250 = vector.shape_cast %249 : vector<1x8x128xf32> to vector<8x128xf32>
    %c2_4 = arith.constant 2 : index
    %251 = arith.index_cast %244 : i32 to index
    %c0_5 = arith.constant 0 : index
    %252 = vector.load %arg2[%c2_4, %251, %c0_5] : memref<7x8x128xf32, #tpu.memory_space<vmem>>, vector<1x8x128xf32>
    %253 = vector.shape_cast %252 : vector<1x8x128xf32> to vector<8x128xf32>
    %c3_6 = arith.constant 3 : index
    %254 = arith.index_cast %244 : i32 to index
    %c0_7 = arith.constant 0 : index
    %255 = vector.load %arg2[%c3_6, %254, %c0_7] : memref<7x8x128xf32, #tpu.memory_space<vmem>>, vector<1x8x128xf32>
    %256 = vector.shape_cast %255 : vector<1x8x128xf32> to vector<8x128xf32>
    %c4_8 = arith.constant 4 : index
    %257 = arith.index_cast %244 : i32 to index
    %c0_9 = arith.constant 0 : index
    %258 = vector.load %arg2[%c4_8, %257, %c0_9] : memref<7x8x128xf32, #tpu.memory_space<vmem>>, vector<1x8x128xf32>
    %259 = vector.shape_cast %258 : vector<1x8x128xf32> to vector<8x128xf32>
    %c5_10 = arith.constant 5 : index
    %260 = arith.index_cast %244 : i32 to index
    %c0_11 = arith.constant 0 : index
    %261 = vector.load %arg2[%c5_10, %260, %c0_11] : memref<7x8x128xf32, #tpu.memory_space<vmem>>, vector<1x8x128xf32>
    %262 = vector.shape_cast %261 : vector<1x8x128xf32> to vector<8x128xf32>
    %c6_12 = arith.constant 6 : index
    %263 = arith.index_cast %244 : i32 to index
    %c0_13 = arith.constant 0 : index
    %264 = vector.load %arg2[%c6_12, %263, %c0_13] : memref<7x8x128xf32, #tpu.memory_space<vmem>>, vector<1x8x128xf32>
    %265 = vector.shape_cast %264 : vector<1x8x128xf32> to vector<8x128xf32>
    %266 = vector.broadcast %0 : f32 to vector<8x128xf32>
    %267 = arith.mulf %247, %266 : vector<8x128xf32>
    %268 = vector.broadcast %10 : f32 to vector<8x128xf32>
    %269 = arith.mulf %250, %268 : vector<8x128xf32>
    %270 = arith.addf %267, %269 : vector<8x128xf32>
    %271 = vector.broadcast %20 : f32 to vector<8x128xf32>
    %272 = arith.mulf %253, %271 : vector<8x128xf32>
    %273 = arith.addf %270, %272 : vector<8x128xf32>
    %274 = vector.broadcast %30 : f32 to vector<8x128xf32>
    %275 = arith.mulf %256, %274 : vector<8x128xf32>
    %276 = arith.addf %273, %275 : vector<8x128xf32>
    %277 = vector.broadcast %40 : f32 to vector<8x128xf32>
    %278 = arith.mulf %259, %277 : vector<8x128xf32>
    %279 = arith.addf %276, %278 : vector<8x128xf32>
    %280 = vector.broadcast %50 : f32 to vector<8x128xf32>
    %281 = arith.mulf %262, %280 : vector<8x128xf32>
    %282 = arith.addf %279, %281 : vector<8x128xf32>
    %283 = vector.broadcast %60 : f32 to vector<8x128xf32>
    %284 = arith.mulf %265, %283 : vector<8x128xf32>
    %285 = arith.addf %282, %284 : vector<8x128xf32>
    %286 = vector.broadcast %70 : f32 to vector<8x128xf32>
    %287 = arith.addf %285, %286 : vector<8x128xf32>
    %cst = arith.constant 0.000000e+00 : f32
    %288 = vector.broadcast %cst : f32 to vector<8x128xf32>
    %289 = arith.maximumf %287, %288 : vector<8x128xf32>
    %290 = vector.broadcast %1 : f32 to vector<8x128xf32>
    %291 = arith.mulf %247, %290 : vector<8x128xf32>
    %292 = vector.broadcast %11 : f32 to vector<8x128xf32>
    %293 = arith.mulf %250, %292 : vector<8x128xf32>
    %294 = arith.addf %291, %293 : vector<8x128xf32>
    %295 = vector.broadcast %21 : f32 to vector<8x128xf32>
    %296 = arith.mulf %253, %295 : vector<8x128xf32>
    %297 = arith.addf %294, %296 : vector<8x128xf32>
    %298 = vector.broadcast %31 : f32 to vector<8x128xf32>
    %299 = arith.mulf %256, %298 : vector<8x128xf32>
    %300 = arith.addf %297, %299 : vector<8x128xf32>
    %301 = vector.broadcast %41 : f32 to vector<8x128xf32>
    %302 = arith.mulf %259, %301 : vector<8x128xf32>
    %303 = arith.addf %300, %302 : vector<8x128xf32>
    %304 = vector.broadcast %51 : f32 to vector<8x128xf32>
    %305 = arith.mulf %262, %304 : vector<8x128xf32>
    %306 = arith.addf %303, %305 : vector<8x128xf32>
    %307 = vector.broadcast %61 : f32 to vector<8x128xf32>
    %308 = arith.mulf %265, %307 : vector<8x128xf32>
    %309 = arith.addf %306, %308 : vector<8x128xf32>
    %310 = vector.broadcast %71 : f32 to vector<8x128xf32>
    %311 = arith.addf %309, %310 : vector<8x128xf32>
    %cst_14 = arith.constant 0.000000e+00 : f32
    %312 = vector.broadcast %cst_14 : f32 to vector<8x128xf32>
    %313 = arith.maximumf %311, %312 : vector<8x128xf32>
    %314 = vector.broadcast %2 : f32 to vector<8x128xf32>
    %315 = arith.mulf %247, %314 : vector<8x128xf32>
    %316 = vector.broadcast %12 : f32 to vector<8x128xf32>
    %317 = arith.mulf %250, %316 : vector<8x128xf32>
    %318 = arith.addf %315, %317 : vector<8x128xf32>
    %319 = vector.broadcast %22 : f32 to vector<8x128xf32>
    %320 = arith.mulf %253, %319 : vector<8x128xf32>
    %321 = arith.addf %318, %320 : vector<8x128xf32>
    %322 = vector.broadcast %32 : f32 to vector<8x128xf32>
    %323 = arith.mulf %256, %322 : vector<8x128xf32>
    %324 = arith.addf %321, %323 : vector<8x128xf32>
    %325 = vector.broadcast %42 : f32 to vector<8x128xf32>
    %326 = arith.mulf %259, %325 : vector<8x128xf32>
    %327 = arith.addf %324, %326 : vector<8x128xf32>
    %328 = vector.broadcast %52 : f32 to vector<8x128xf32>
    %329 = arith.mulf %262, %328 : vector<8x128xf32>
    %330 = arith.addf %327, %329 : vector<8x128xf32>
    %331 = vector.broadcast %62 : f32 to vector<8x128xf32>
    %332 = arith.mulf %265, %331 : vector<8x128xf32>
    %333 = arith.addf %330, %332 : vector<8x128xf32>
    %334 = vector.broadcast %72 : f32 to vector<8x128xf32>
    %335 = arith.addf %333, %334 : vector<8x128xf32>
    %cst_15 = arith.constant 0.000000e+00 : f32
    %336 = vector.broadcast %cst_15 : f32 to vector<8x128xf32>
    %337 = arith.maximumf %335, %336 : vector<8x128xf32>
    %338 = vector.broadcast %3 : f32 to vector<8x128xf32>
    %339 = arith.mulf %247, %338 : vector<8x128xf32>
    %340 = vector.broadcast %13 : f32 to vector<8x128xf32>
    %341 = arith.mulf %250, %340 : vector<8x128xf32>
    %342 = arith.addf %339, %341 : vector<8x128xf32>
    %343 = vector.broadcast %23 : f32 to vector<8x128xf32>
    %344 = arith.mulf %253, %343 : vector<8x128xf32>
    %345 = arith.addf %342, %344 : vector<8x128xf32>
    %346 = vector.broadcast %33 : f32 to vector<8x128xf32>
    %347 = arith.mulf %256, %346 : vector<8x128xf32>
    %348 = arith.addf %345, %347 : vector<8x128xf32>
    %349 = vector.broadcast %43 : f32 to vector<8x128xf32>
    %350 = arith.mulf %259, %349 : vector<8x128xf32>
    %351 = arith.addf %348, %350 : vector<8x128xf32>
    %352 = vector.broadcast %53 : f32 to vector<8x128xf32>
    %353 = arith.mulf %262, %352 : vector<8x128xf32>
    %354 = arith.addf %351, %353 : vector<8x128xf32>
    %355 = vector.broadcast %63 : f32 to vector<8x128xf32>
    %356 = arith.mulf %265, %355 : vector<8x128xf32>
    %357 = arith.addf %354, %356 : vector<8x128xf32>
    %358 = vector.broadcast %73 : f32 to vector<8x128xf32>
    %359 = arith.addf %357, %358 : vector<8x128xf32>
    %cst_16 = arith.constant 0.000000e+00 : f32
    %360 = vector.broadcast %cst_16 : f32 to vector<8x128xf32>
    %361 = arith.maximumf %359, %360 : vector<8x128xf32>
    %362 = vector.broadcast %4 : f32 to vector<8x128xf32>
    %363 = arith.mulf %247, %362 : vector<8x128xf32>
    %364 = vector.broadcast %14 : f32 to vector<8x128xf32>
    %365 = arith.mulf %250, %364 : vector<8x128xf32>
    %366 = arith.addf %363, %365 : vector<8x128xf32>
    %367 = vector.broadcast %24 : f32 to vector<8x128xf32>
    %368 = arith.mulf %253, %367 : vector<8x128xf32>
    %369 = arith.addf %366, %368 : vector<8x128xf32>
    %370 = vector.broadcast %34 : f32 to vector<8x128xf32>
    %371 = arith.mulf %256, %370 : vector<8x128xf32>
    %372 = arith.addf %369, %371 : vector<8x128xf32>
    %373 = vector.broadcast %44 : f32 to vector<8x128xf32>
    %374 = arith.mulf %259, %373 : vector<8x128xf32>
    %375 = arith.addf %372, %374 : vector<8x128xf32>
    %376 = vector.broadcast %54 : f32 to vector<8x128xf32>
    %377 = arith.mulf %262, %376 : vector<8x128xf32>
    %378 = arith.addf %375, %377 : vector<8x128xf32>
    %379 = vector.broadcast %64 : f32 to vector<8x128xf32>
    %380 = arith.mulf %265, %379 : vector<8x128xf32>
    %381 = arith.addf %378, %380 : vector<8x128xf32>
    %382 = vector.broadcast %74 : f32 to vector<8x128xf32>
    %383 = arith.addf %381, %382 : vector<8x128xf32>
    %cst_17 = arith.constant 0.000000e+00 : f32
    %384 = vector.broadcast %cst_17 : f32 to vector<8x128xf32>
    %385 = arith.maximumf %383, %384 : vector<8x128xf32>
    %386 = vector.broadcast %5 : f32 to vector<8x128xf32>
    %387 = arith.mulf %247, %386 : vector<8x128xf32>
    %388 = vector.broadcast %15 : f32 to vector<8x128xf32>
    %389 = arith.mulf %250, %388 : vector<8x128xf32>
    %390 = arith.addf %387, %389 : vector<8x128xf32>
    %391 = vector.broadcast %25 : f32 to vector<8x128xf32>
    %392 = arith.mulf %253, %391 : vector<8x128xf32>
    %393 = arith.addf %390, %392 : vector<8x128xf32>
    %394 = vector.broadcast %35 : f32 to vector<8x128xf32>
    %395 = arith.mulf %256, %394 : vector<8x128xf32>
    %396 = arith.addf %393, %395 : vector<8x128xf32>
    %397 = vector.broadcast %45 : f32 to vector<8x128xf32>
    %398 = arith.mulf %259, %397 : vector<8x128xf32>
    %399 = arith.addf %396, %398 : vector<8x128xf32>
    %400 = vector.broadcast %55 : f32 to vector<8x128xf32>
    %401 = arith.mulf %262, %400 : vector<8x128xf32>
    %402 = arith.addf %399, %401 : vector<8x128xf32>
    %403 = vector.broadcast %65 : f32 to vector<8x128xf32>
    %404 = arith.mulf %265, %403 : vector<8x128xf32>
    %405 = arith.addf %402, %404 : vector<8x128xf32>
    %406 = vector.broadcast %75 : f32 to vector<8x128xf32>
    %407 = arith.addf %405, %406 : vector<8x128xf32>
    %cst_18 = arith.constant 0.000000e+00 : f32
    %408 = vector.broadcast %cst_18 : f32 to vector<8x128xf32>
    %409 = arith.maximumf %407, %408 : vector<8x128xf32>
    %410 = vector.broadcast %6 : f32 to vector<8x128xf32>
    %411 = arith.mulf %247, %410 : vector<8x128xf32>
    %412 = vector.broadcast %16 : f32 to vector<8x128xf32>
    %413 = arith.mulf %250, %412 : vector<8x128xf32>
    %414 = arith.addf %411, %413 : vector<8x128xf32>
    %415 = vector.broadcast %26 : f32 to vector<8x128xf32>
    %416 = arith.mulf %253, %415 : vector<8x128xf32>
    %417 = arith.addf %414, %416 : vector<8x128xf32>
    %418 = vector.broadcast %36 : f32 to vector<8x128xf32>
    %419 = arith.mulf %256, %418 : vector<8x128xf32>
    %420 = arith.addf %417, %419 : vector<8x128xf32>
    %421 = vector.broadcast %46 : f32 to vector<8x128xf32>
    %422 = arith.mulf %259, %421 : vector<8x128xf32>
    %423 = arith.addf %420, %422 : vector<8x128xf32>
    %424 = vector.broadcast %56 : f32 to vector<8x128xf32>
    %425 = arith.mulf %262, %424 : vector<8x128xf32>
    %426 = arith.addf %423, %425 : vector<8x128xf32>
    %427 = vector.broadcast %66 : f32 to vector<8x128xf32>
    %428 = arith.mulf %265, %427 : vector<8x128xf32>
    %429 = arith.addf %426, %428 : vector<8x128xf32>
    %430 = vector.broadcast %76 : f32 to vector<8x128xf32>
    %431 = arith.addf %429, %430 : vector<8x128xf32>
    %cst_19 = arith.constant 0.000000e+00 : f32
    %432 = vector.broadcast %cst_19 : f32 to vector<8x128xf32>
    %433 = arith.maximumf %431, %432 : vector<8x128xf32>
    %434 = vector.broadcast %7 : f32 to vector<8x128xf32>
    %435 = arith.mulf %247, %434 : vector<8x128xf32>
    %436 = vector.broadcast %17 : f32 to vector<8x128xf32>
    %437 = arith.mulf %250, %436 : vector<8x128xf32>
    %438 = arith.addf %435, %437 : vector<8x128xf32>
    %439 = vector.broadcast %27 : f32 to vector<8x128xf32>
    %440 = arith.mulf %253, %439 : vector<8x128xf32>
    %441 = arith.addf %438, %440 : vector<8x128xf32>
    %442 = vector.broadcast %37 : f32 to vector<8x128xf32>
    %443 = arith.mulf %256, %442 : vector<8x128xf32>
    %444 = arith.addf %441, %443 : vector<8x128xf32>
    %445 = vector.broadcast %47 : f32 to vector<8x128xf32>
    %446 = arith.mulf %259, %445 : vector<8x128xf32>
    %447 = arith.addf %444, %446 : vector<8x128xf32>
    %448 = vector.broadcast %57 : f32 to vector<8x128xf32>
    %449 = arith.mulf %262, %448 : vector<8x128xf32>
    %450 = arith.addf %447, %449 : vector<8x128xf32>
    %451 = vector.broadcast %67 : f32 to vector<8x128xf32>
    %452 = arith.mulf %265, %451 : vector<8x128xf32>
    %453 = arith.addf %450, %452 : vector<8x128xf32>
    %454 = vector.broadcast %77 : f32 to vector<8x128xf32>
    %455 = arith.addf %453, %454 : vector<8x128xf32>
    %cst_20 = arith.constant 0.000000e+00 : f32
    %456 = vector.broadcast %cst_20 : f32 to vector<8x128xf32>
    %457 = arith.maximumf %455, %456 : vector<8x128xf32>
    %458 = vector.broadcast %8 : f32 to vector<8x128xf32>
    %459 = arith.mulf %247, %458 : vector<8x128xf32>
    %460 = vector.broadcast %18 : f32 to vector<8x128xf32>
    %461 = arith.mulf %250, %460 : vector<8x128xf32>
    %462 = arith.addf %459, %461 : vector<8x128xf32>
    %463 = vector.broadcast %28 : f32 to vector<8x128xf32>
    %464 = arith.mulf %253, %463 : vector<8x128xf32>
    %465 = arith.addf %462, %464 : vector<8x128xf32>
    %466 = vector.broadcast %38 : f32 to vector<8x128xf32>
    %467 = arith.mulf %256, %466 : vector<8x128xf32>
    %468 = arith.addf %465, %467 : vector<8x128xf32>
    %469 = vector.broadcast %48 : f32 to vector<8x128xf32>
    %470 = arith.mulf %259, %469 : vector<8x128xf32>
    %471 = arith.addf %468, %470 : vector<8x128xf32>
    %472 = vector.broadcast %58 : f32 to vector<8x128xf32>
    %473 = arith.mulf %262, %472 : vector<8x128xf32>
    %474 = arith.addf %471, %473 : vector<8x128xf32>
    %475 = vector.broadcast %68 : f32 to vector<8x128xf32>
    %476 = arith.mulf %265, %475 : vector<8x128xf32>
    %477 = arith.addf %474, %476 : vector<8x128xf32>
    %478 = vector.broadcast %78 : f32 to vector<8x128xf32>
    %479 = arith.addf %477, %478 : vector<8x128xf32>
    %cst_21 = arith.constant 0.000000e+00 : f32
    %480 = vector.broadcast %cst_21 : f32 to vector<8x128xf32>
    %481 = arith.maximumf %479, %480 : vector<8x128xf32>
    %482 = vector.broadcast %9 : f32 to vector<8x128xf32>
    %483 = arith.mulf %247, %482 : vector<8x128xf32>
    %484 = vector.broadcast %19 : f32 to vector<8x128xf32>
    %485 = arith.mulf %250, %484 : vector<8x128xf32>
    %486 = arith.addf %483, %485 : vector<8x128xf32>
    %487 = vector.broadcast %29 : f32 to vector<8x128xf32>
    %488 = arith.mulf %253, %487 : vector<8x128xf32>
    %489 = arith.addf %486, %488 : vector<8x128xf32>
    %490 = vector.broadcast %39 : f32 to vector<8x128xf32>
    %491 = arith.mulf %256, %490 : vector<8x128xf32>
    %492 = arith.addf %489, %491 : vector<8x128xf32>
    %493 = vector.broadcast %49 : f32 to vector<8x128xf32>
    %494 = arith.mulf %259, %493 : vector<8x128xf32>
    %495 = arith.addf %492, %494 : vector<8x128xf32>
    %496 = vector.broadcast %59 : f32 to vector<8x128xf32>
    %497 = arith.mulf %262, %496 : vector<8x128xf32>
    %498 = arith.addf %495, %497 : vector<8x128xf32>
    %499 = vector.broadcast %69 : f32 to vector<8x128xf32>
    %500 = arith.mulf %265, %499 : vector<8x128xf32>
    %501 = arith.addf %498, %500 : vector<8x128xf32>
    %502 = vector.broadcast %79 : f32 to vector<8x128xf32>
    %503 = arith.addf %501, %502 : vector<8x128xf32>
    %cst_22 = arith.constant 0.000000e+00 : f32
    %504 = vector.broadcast %cst_22 : f32 to vector<8x128xf32>
    %505 = arith.maximumf %503, %504 : vector<8x128xf32>
    %506 = vector.broadcast %80 : f32 to vector<8x128xf32>
    %507 = arith.mulf %289, %506 : vector<8x128xf32>
    %508 = vector.broadcast %88 : f32 to vector<8x128xf32>
    %509 = arith.mulf %313, %508 : vector<8x128xf32>
    %510 = arith.addf %507, %509 : vector<8x128xf32>
    %511 = vector.broadcast %96 : f32 to vector<8x128xf32>
    %512 = arith.mulf %337, %511 : vector<8x128xf32>
    %513 = arith.addf %510, %512 : vector<8x128xf32>
    %514 = vector.broadcast %104 : f32 to vector<8x128xf32>
    %515 = arith.mulf %361, %514 : vector<8x128xf32>
    %516 = arith.addf %513, %515 : vector<8x128xf32>
    %517 = vector.broadcast %112 : f32 to vector<8x128xf32>
    %518 = arith.mulf %385, %517 : vector<8x128xf32>
    %519 = arith.addf %516, %518 : vector<8x128xf32>
    %520 = vector.broadcast %120 : f32 to vector<8x128xf32>
    %521 = arith.mulf %409, %520 : vector<8x128xf32>
    %522 = arith.addf %519, %521 : vector<8x128xf32>
    %523 = vector.broadcast %128 : f32 to vector<8x128xf32>
    %524 = arith.mulf %433, %523 : vector<8x128xf32>
    %525 = arith.addf %522, %524 : vector<8x128xf32>
    %526 = vector.broadcast %136 : f32 to vector<8x128xf32>
    %527 = arith.mulf %457, %526 : vector<8x128xf32>
    %528 = arith.addf %525, %527 : vector<8x128xf32>
    %529 = vector.broadcast %144 : f32 to vector<8x128xf32>
    %530 = arith.mulf %481, %529 : vector<8x128xf32>
    %531 = arith.addf %528, %530 : vector<8x128xf32>
    %532 = vector.broadcast %152 : f32 to vector<8x128xf32>
    %533 = arith.mulf %505, %532 : vector<8x128xf32>
    %534 = arith.addf %531, %533 : vector<8x128xf32>
    %535 = vector.broadcast %160 : f32 to vector<8x128xf32>
    %536 = arith.addf %534, %535 : vector<8x128xf32>
    %cst_23 = arith.constant 0.000000e+00 : f32
    %537 = vector.broadcast %cst_23 : f32 to vector<8x128xf32>
    %538 = arith.maximumf %536, %537 : vector<8x128xf32>
    %539 = vector.broadcast %81 : f32 to vector<8x128xf32>
    %540 = arith.mulf %289, %539 : vector<8x128xf32>
    %541 = vector.broadcast %89 : f32 to vector<8x128xf32>
    %542 = arith.mulf %313, %541 : vector<8x128xf32>
    %543 = arith.addf %540, %542 : vector<8x128xf32>
    %544 = vector.broadcast %97 : f32 to vector<8x128xf32>
    %545 = arith.mulf %337, %544 : vector<8x128xf32>
    %546 = arith.addf %543, %545 : vector<8x128xf32>
    %547 = vector.broadcast %105 : f32 to vector<8x128xf32>
    %548 = arith.mulf %361, %547 : vector<8x128xf32>
    %549 = arith.addf %546, %548 : vector<8x128xf32>
    %550 = vector.broadcast %113 : f32 to vector<8x128xf32>
    %551 = arith.mulf %385, %550 : vector<8x128xf32>
    %552 = arith.addf %549, %551 : vector<8x128xf32>
    %553 = vector.broadcast %121 : f32 to vector<8x128xf32>
    %554 = arith.mulf %409, %553 : vector<8x128xf32>
    %555 = arith.addf %552, %554 : vector<8x128xf32>
    %556 = vector.broadcast %129 : f32 to vector<8x128xf32>
    %557 = arith.mulf %433, %556 : vector<8x128xf32>
    %558 = arith.addf %555, %557 : vector<8x128xf32>
    %559 = vector.broadcast %137 : f32 to vector<8x128xf32>
    %560 = arith.mulf %457, %559 : vector<8x128xf32>
    %561 = arith.addf %558, %560 : vector<8x128xf32>
    %562 = vector.broadcast %145 : f32 to vector<8x128xf32>
    %563 = arith.mulf %481, %562 : vector<8x128xf32>
    %564 = arith.addf %561, %563 : vector<8x128xf32>
    %565 = vector.broadcast %153 : f32 to vector<8x128xf32>
    %566 = arith.mulf %505, %565 : vector<8x128xf32>
    %567 = arith.addf %564, %566 : vector<8x128xf32>
    %568 = vector.broadcast %161 : f32 to vector<8x128xf32>
    %569 = arith.addf %567, %568 : vector<8x128xf32>
    %cst_24 = arith.constant 0.000000e+00 : f32
    %570 = vector.broadcast %cst_24 : f32 to vector<8x128xf32>
    %571 = arith.maximumf %569, %570 : vector<8x128xf32>
    %572 = vector.broadcast %82 : f32 to vector<8x128xf32>
    %573 = arith.mulf %289, %572 : vector<8x128xf32>
    %574 = vector.broadcast %90 : f32 to vector<8x128xf32>
    %575 = arith.mulf %313, %574 : vector<8x128xf32>
    %576 = arith.addf %573, %575 : vector<8x128xf32>
    %577 = vector.broadcast %98 : f32 to vector<8x128xf32>
    %578 = arith.mulf %337, %577 : vector<8x128xf32>
    %579 = arith.addf %576, %578 : vector<8x128xf32>
    %580 = vector.broadcast %106 : f32 to vector<8x128xf32>
    %581 = arith.mulf %361, %580 : vector<8x128xf32>
    %582 = arith.addf %579, %581 : vector<8x128xf32>
    %583 = vector.broadcast %114 : f32 to vector<8x128xf32>
    %584 = arith.mulf %385, %583 : vector<8x128xf32>
    %585 = arith.addf %582, %584 : vector<8x128xf32>
    %586 = vector.broadcast %122 : f32 to vector<8x128xf32>
    %587 = arith.mulf %409, %586 : vector<8x128xf32>
    %588 = arith.addf %585, %587 : vector<8x128xf32>
    %589 = vector.broadcast %130 : f32 to vector<8x128xf32>
    %590 = arith.mulf %433, %589 : vector<8x128xf32>
    %591 = arith.addf %588, %590 : vector<8x128xf32>
    %592 = vector.broadcast %138 : f32 to vector<8x128xf32>
    %593 = arith.mulf %457, %592 : vector<8x128xf32>
    %594 = arith.addf %591, %593 : vector<8x128xf32>
    %595 = vector.broadcast %146 : f32 to vector<8x128xf32>
    %596 = arith.mulf %481, %595 : vector<8x128xf32>
    %597 = arith.addf %594, %596 : vector<8x128xf32>
    %598 = vector.broadcast %154 : f32 to vector<8x128xf32>
    %599 = arith.mulf %505, %598 : vector<8x128xf32>
    %600 = arith.addf %597, %599 : vector<8x128xf32>
    %601 = vector.broadcast %162 : f32 to vector<8x128xf32>
    %602 = arith.addf %600, %601 : vector<8x128xf32>
    %cst_25 = arith.constant 0.000000e+00 : f32
    %603 = vector.broadcast %cst_25 : f32 to vector<8x128xf32>
    %604 = arith.maximumf %602, %603 : vector<8x128xf32>
    %605 = vector.broadcast %83 : f32 to vector<8x128xf32>
    %606 = arith.mulf %289, %605 : vector<8x128xf32>
    %607 = vector.broadcast %91 : f32 to vector<8x128xf32>
    %608 = arith.mulf %313, %607 : vector<8x128xf32>
    %609 = arith.addf %606, %608 : vector<8x128xf32>
    %610 = vector.broadcast %99 : f32 to vector<8x128xf32>
    %611 = arith.mulf %337, %610 : vector<8x128xf32>
    %612 = arith.addf %609, %611 : vector<8x128xf32>
    %613 = vector.broadcast %107 : f32 to vector<8x128xf32>
    %614 = arith.mulf %361, %613 : vector<8x128xf32>
    %615 = arith.addf %612, %614 : vector<8x128xf32>
    %616 = vector.broadcast %115 : f32 to vector<8x128xf32>
    %617 = arith.mulf %385, %616 : vector<8x128xf32>
    %618 = arith.addf %615, %617 : vector<8x128xf32>
    %619 = vector.broadcast %123 : f32 to vector<8x128xf32>
    %620 = arith.mulf %409, %619 : vector<8x128xf32>
    %621 = arith.addf %618, %620 : vector<8x128xf32>
    %622 = vector.broadcast %131 : f32 to vector<8x128xf32>
    %623 = arith.mulf %433, %622 : vector<8x128xf32>
    %624 = arith.addf %621, %623 : vector<8x128xf32>
    %625 = vector.broadcast %139 : f32 to vector<8x128xf32>
    %626 = arith.mulf %457, %625 : vector<8x128xf32>
    %627 = arith.addf %624, %626 : vector<8x128xf32>
    %628 = vector.broadcast %147 : f32 to vector<8x128xf32>
    %629 = arith.mulf %481, %628 : vector<8x128xf32>
    %630 = arith.addf %627, %629 : vector<8x128xf32>
    %631 = vector.broadcast %155 : f32 to vector<8x128xf32>
    %632 = arith.mulf %505, %631 : vector<8x128xf32>
    %633 = arith.addf %630, %632 : vector<8x128xf32>
    %634 = vector.broadcast %163 : f32 to vector<8x128xf32>
    %635 = arith.addf %633, %634 : vector<8x128xf32>
    %cst_26 = arith.constant 0.000000e+00 : f32
    %636 = vector.broadcast %cst_26 : f32 to vector<8x128xf32>
    %637 = arith.maximumf %635, %636 : vector<8x128xf32>
    %638 = vector.broadcast %84 : f32 to vector<8x128xf32>
    %639 = arith.mulf %289, %638 : vector<8x128xf32>
    %640 = vector.broadcast %92 : f32 to vector<8x128xf32>
    %641 = arith.mulf %313, %640 : vector<8x128xf32>
    %642 = arith.addf %639, %641 : vector<8x128xf32>
    %643 = vector.broadcast %100 : f32 to vector<8x128xf32>
    %644 = arith.mulf %337, %643 : vector<8x128xf32>
    %645 = arith.addf %642, %644 : vector<8x128xf32>
    %646 = vector.broadcast %108 : f32 to vector<8x128xf32>
    %647 = arith.mulf %361, %646 : vector<8x128xf32>
    %648 = arith.addf %645, %647 : vector<8x128xf32>
    %649 = vector.broadcast %116 : f32 to vector<8x128xf32>
    %650 = arith.mulf %385, %649 : vector<8x128xf32>
    %651 = arith.addf %648, %650 : vector<8x128xf32>
    %652 = vector.broadcast %124 : f32 to vector<8x128xf32>
    %653 = arith.mulf %409, %652 : vector<8x128xf32>
    %654 = arith.addf %651, %653 : vector<8x128xf32>
    %655 = vector.broadcast %132 : f32 to vector<8x128xf32>
    %656 = arith.mulf %433, %655 : vector<8x128xf32>
    %657 = arith.addf %654, %656 : vector<8x128xf32>
    %658 = vector.broadcast %140 : f32 to vector<8x128xf32>
    %659 = arith.mulf %457, %658 : vector<8x128xf32>
    %660 = arith.addf %657, %659 : vector<8x128xf32>
    %661 = vector.broadcast %148 : f32 to vector<8x128xf32>
    %662 = arith.mulf %481, %661 : vector<8x128xf32>
    %663 = arith.addf %660, %662 : vector<8x128xf32>
    %664 = vector.broadcast %156 : f32 to vector<8x128xf32>
    %665 = arith.mulf %505, %664 : vector<8x128xf32>
    %666 = arith.addf %663, %665 : vector<8x128xf32>
    %667 = vector.broadcast %164 : f32 to vector<8x128xf32>
    %668 = arith.addf %666, %667 : vector<8x128xf32>
    %cst_27 = arith.constant 0.000000e+00 : f32
    %669 = vector.broadcast %cst_27 : f32 to vector<8x128xf32>
    %670 = arith.maximumf %668, %669 : vector<8x128xf32>
    %671 = vector.broadcast %85 : f32 to vector<8x128xf32>
    %672 = arith.mulf %289, %671 : vector<8x128xf32>
    %673 = vector.broadcast %93 : f32 to vector<8x128xf32>
    %674 = arith.mulf %313, %673 : vector<8x128xf32>
    %675 = arith.addf %672, %674 : vector<8x128xf32>
    %676 = vector.broadcast %101 : f32 to vector<8x128xf32>
    %677 = arith.mulf %337, %676 : vector<8x128xf32>
    %678 = arith.addf %675, %677 : vector<8x128xf32>
    %679 = vector.broadcast %109 : f32 to vector<8x128xf32>
    %680 = arith.mulf %361, %679 : vector<8x128xf32>
    %681 = arith.addf %678, %680 : vector<8x128xf32>
    %682 = vector.broadcast %117 : f32 to vector<8x128xf32>
    %683 = arith.mulf %385, %682 : vector<8x128xf32>
    %684 = arith.addf %681, %683 : vector<8x128xf32>
    %685 = vector.broadcast %125 : f32 to vector<8x128xf32>
    %686 = arith.mulf %409, %685 : vector<8x128xf32>
    %687 = arith.addf %684, %686 : vector<8x128xf32>
    %688 = vector.broadcast %133 : f32 to vector<8x128xf32>
    %689 = arith.mulf %433, %688 : vector<8x128xf32>
    %690 = arith.addf %687, %689 : vector<8x128xf32>
    %691 = vector.broadcast %141 : f32 to vector<8x128xf32>
    %692 = arith.mulf %457, %691 : vector<8x128xf32>
    %693 = arith.addf %690, %692 : vector<8x128xf32>
    %694 = vector.broadcast %149 : f32 to vector<8x128xf32>
    %695 = arith.mulf %481, %694 : vector<8x128xf32>
    %696 = arith.addf %693, %695 : vector<8x128xf32>
    %697 = vector.broadcast %157 : f32 to vector<8x128xf32>
    %698 = arith.mulf %505, %697 : vector<8x128xf32>
    %699 = arith.addf %696, %698 : vector<8x128xf32>
    %700 = vector.broadcast %165 : f32 to vector<8x128xf32>
    %701 = arith.addf %699, %700 : vector<8x128xf32>
    %cst_28 = arith.constant 0.000000e+00 : f32
    %702 = vector.broadcast %cst_28 : f32 to vector<8x128xf32>
    %703 = arith.maximumf %701, %702 : vector<8x128xf32>
    %704 = vector.broadcast %86 : f32 to vector<8x128xf32>
    %705 = arith.mulf %289, %704 : vector<8x128xf32>
    %706 = vector.broadcast %94 : f32 to vector<8x128xf32>
    %707 = arith.mulf %313, %706 : vector<8x128xf32>
    %708 = arith.addf %705, %707 : vector<8x128xf32>
    %709 = vector.broadcast %102 : f32 to vector<8x128xf32>
    %710 = arith.mulf %337, %709 : vector<8x128xf32>
    %711 = arith.addf %708, %710 : vector<8x128xf32>
    %712 = vector.broadcast %110 : f32 to vector<8x128xf32>
    %713 = arith.mulf %361, %712 : vector<8x128xf32>
    %714 = arith.addf %711, %713 : vector<8x128xf32>
    %715 = vector.broadcast %118 : f32 to vector<8x128xf32>
    %716 = arith.mulf %385, %715 : vector<8x128xf32>
    %717 = arith.addf %714, %716 : vector<8x128xf32>
    %718 = vector.broadcast %126 : f32 to vector<8x128xf32>
    %719 = arith.mulf %409, %718 : vector<8x128xf32>
    %720 = arith.addf %717, %719 : vector<8x128xf32>
    %721 = vector.broadcast %134 : f32 to vector<8x128xf32>
    %722 = arith.mulf %433, %721 : vector<8x128xf32>
    %723 = arith.addf %720, %722 : vector<8x128xf32>
    %724 = vector.broadcast %142 : f32 to vector<8x128xf32>
    %725 = arith.mulf %457, %724 : vector<8x128xf32>
    %726 = arith.addf %723, %725 : vector<8x128xf32>
    %727 = vector.broadcast %150 : f32 to vector<8x128xf32>
    %728 = arith.mulf %481, %727 : vector<8x128xf32>
    %729 = arith.addf %726, %728 : vector<8x128xf32>
    %730 = vector.broadcast %158 : f32 to vector<8x128xf32>
    %731 = arith.mulf %505, %730 : vector<8x128xf32>
    %732 = arith.addf %729, %731 : vector<8x128xf32>
    %733 = vector.broadcast %166 : f32 to vector<8x128xf32>
    %734 = arith.addf %732, %733 : vector<8x128xf32>
    %cst_29 = arith.constant 0.000000e+00 : f32
    %735 = vector.broadcast %cst_29 : f32 to vector<8x128xf32>
    %736 = arith.maximumf %734, %735 : vector<8x128xf32>
    %737 = vector.broadcast %87 : f32 to vector<8x128xf32>
    %738 = arith.mulf %289, %737 : vector<8x128xf32>
    %739 = vector.broadcast %95 : f32 to vector<8x128xf32>
    %740 = arith.mulf %313, %739 : vector<8x128xf32>
    %741 = arith.addf %738, %740 : vector<8x128xf32>
    %742 = vector.broadcast %103 : f32 to vector<8x128xf32>
    %743 = arith.mulf %337, %742 : vector<8x128xf32>
    %744 = arith.addf %741, %743 : vector<8x128xf32>
    %745 = vector.broadcast %111 : f32 to vector<8x128xf32>
    %746 = arith.mulf %361, %745 : vector<8x128xf32>
    %747 = arith.addf %744, %746 : vector<8x128xf32>
    %748 = vector.broadcast %119 : f32 to vector<8x128xf32>
    %749 = arith.mulf %385, %748 : vector<8x128xf32>
    %750 = arith.addf %747, %749 : vector<8x128xf32>
    %751 = vector.broadcast %127 : f32 to vector<8x128xf32>
    %752 = arith.mulf %409, %751 : vector<8x128xf32>
    %753 = arith.addf %750, %752 : vector<8x128xf32>
    %754 = vector.broadcast %135 : f32 to vector<8x128xf32>
    %755 = arith.mulf %433, %754 : vector<8x128xf32>
    %756 = arith.addf %753, %755 : vector<8x128xf32>
    %757 = vector.broadcast %143 : f32 to vector<8x128xf32>
    %758 = arith.mulf %457, %757 : vector<8x128xf32>
    %759 = arith.addf %756, %758 : vector<8x128xf32>
    %760 = vector.broadcast %151 : f32 to vector<8x128xf32>
    %761 = arith.mulf %481, %760 : vector<8x128xf32>
    %762 = arith.addf %759, %761 : vector<8x128xf32>
    %763 = vector.broadcast %159 : f32 to vector<8x128xf32>
    %764 = arith.mulf %505, %763 : vector<8x128xf32>
    %765 = arith.addf %762, %764 : vector<8x128xf32>
    %766 = vector.broadcast %167 : f32 to vector<8x128xf32>
    %767 = arith.addf %765, %766 : vector<8x128xf32>
    %cst_30 = arith.constant 0.000000e+00 : f32
    %768 = vector.broadcast %cst_30 : f32 to vector<8x128xf32>
    %769 = arith.maximumf %767, %768 : vector<8x128xf32>
    %770 = vector.broadcast %168 : f32 to vector<8x128xf32>
    %771 = arith.mulf %538, %770 : vector<8x128xf32>
    %772 = vector.broadcast %174 : f32 to vector<8x128xf32>
    %773 = arith.mulf %571, %772 : vector<8x128xf32>
    %774 = arith.addf %771, %773 : vector<8x128xf32>
    %775 = vector.broadcast %180 : f32 to vector<8x128xf32>
    %776 = arith.mulf %604, %775 : vector<8x128xf32>
    %777 = arith.addf %774, %776 : vector<8x128xf32>
    %778 = vector.broadcast %186 : f32 to vector<8x128xf32>
    %779 = arith.mulf %637, %778 : vector<8x128xf32>
    %780 = arith.addf %777, %779 : vector<8x128xf32>
    %781 = vector.broadcast %192 : f32 to vector<8x128xf32>
    %782 = arith.mulf %670, %781 : vector<8x128xf32>
    %783 = arith.addf %780, %782 : vector<8x128xf32>
    %784 = vector.broadcast %198 : f32 to vector<8x128xf32>
    %785 = arith.mulf %703, %784 : vector<8x128xf32>
    %786 = arith.addf %783, %785 : vector<8x128xf32>
    %787 = vector.broadcast %204 : f32 to vector<8x128xf32>
    %788 = arith.mulf %736, %787 : vector<8x128xf32>
    %789 = arith.addf %786, %788 : vector<8x128xf32>
    %790 = vector.broadcast %210 : f32 to vector<8x128xf32>
    %791 = arith.mulf %769, %790 : vector<8x128xf32>
    %792 = arith.addf %789, %791 : vector<8x128xf32>
    %793 = vector.broadcast %216 : f32 to vector<8x128xf32>
    %794 = arith.addf %792, %793 : vector<8x128xf32>
    %cst_31 = arith.constant 0.000000e+00 : f32
    %795 = vector.broadcast %cst_31 : f32 to vector<8x128xf32>
    %796 = arith.maximumf %794, %795 : vector<8x128xf32>
    %797 = vector.broadcast %169 : f32 to vector<8x128xf32>
    %798 = arith.mulf %538, %797 : vector<8x128xf32>
    %799 = vector.broadcast %175 : f32 to vector<8x128xf32>
    %800 = arith.mulf %571, %799 : vector<8x128xf32>
    %801 = arith.addf %798, %800 : vector<8x128xf32>
    %802 = vector.broadcast %181 : f32 to vector<8x128xf32>
    %803 = arith.mulf %604, %802 : vector<8x128xf32>
    %804 = arith.addf %801, %803 : vector<8x128xf32>
    %805 = vector.broadcast %187 : f32 to vector<8x128xf32>
    %806 = arith.mulf %637, %805 : vector<8x128xf32>
    %807 = arith.addf %804, %806 : vector<8x128xf32>
    %808 = vector.broadcast %193 : f32 to vector<8x128xf32>
    %809 = arith.mulf %670, %808 : vector<8x128xf32>
    %810 = arith.addf %807, %809 : vector<8x128xf32>
    %811 = vector.broadcast %199 : f32 to vector<8x128xf32>
    %812 = arith.mulf %703, %811 : vector<8x128xf32>
    %813 = arith.addf %810, %812 : vector<8x128xf32>
    %814 = vector.broadcast %205 : f32 to vector<8x128xf32>
    %815 = arith.mulf %736, %814 : vector<8x128xf32>
    %816 = arith.addf %813, %815 : vector<8x128xf32>
    %817 = vector.broadcast %211 : f32 to vector<8x128xf32>
    %818 = arith.mulf %769, %817 : vector<8x128xf32>
    %819 = arith.addf %816, %818 : vector<8x128xf32>
    %820 = vector.broadcast %217 : f32 to vector<8x128xf32>
    %821 = arith.addf %819, %820 : vector<8x128xf32>
    %cst_32 = arith.constant 0.000000e+00 : f32
    %822 = vector.broadcast %cst_32 : f32 to vector<8x128xf32>
    %823 = arith.maximumf %821, %822 : vector<8x128xf32>
    %824 = vector.broadcast %170 : f32 to vector<8x128xf32>
    %825 = arith.mulf %538, %824 : vector<8x128xf32>
    %826 = vector.broadcast %176 : f32 to vector<8x128xf32>
    %827 = arith.mulf %571, %826 : vector<8x128xf32>
    %828 = arith.addf %825, %827 : vector<8x128xf32>
    %829 = vector.broadcast %182 : f32 to vector<8x128xf32>
    %830 = arith.mulf %604, %829 : vector<8x128xf32>
    %831 = arith.addf %828, %830 : vector<8x128xf32>
    %832 = vector.broadcast %188 : f32 to vector<8x128xf32>
    %833 = arith.mulf %637, %832 : vector<8x128xf32>
    %834 = arith.addf %831, %833 : vector<8x128xf32>
    %835 = vector.broadcast %194 : f32 to vector<8x128xf32>
    %836 = arith.mulf %670, %835 : vector<8x128xf32>
    %837 = arith.addf %834, %836 : vector<8x128xf32>
    %838 = vector.broadcast %200 : f32 to vector<8x128xf32>
    %839 = arith.mulf %703, %838 : vector<8x128xf32>
    %840 = arith.addf %837, %839 : vector<8x128xf32>
    %841 = vector.broadcast %206 : f32 to vector<8x128xf32>
    %842 = arith.mulf %736, %841 : vector<8x128xf32>
    %843 = arith.addf %840, %842 : vector<8x128xf32>
    %844 = vector.broadcast %212 : f32 to vector<8x128xf32>
    %845 = arith.mulf %769, %844 : vector<8x128xf32>
    %846 = arith.addf %843, %845 : vector<8x128xf32>
    %847 = vector.broadcast %218 : f32 to vector<8x128xf32>
    %848 = arith.addf %846, %847 : vector<8x128xf32>
    %cst_33 = arith.constant 0.000000e+00 : f32
    %849 = vector.broadcast %cst_33 : f32 to vector<8x128xf32>
    %850 = arith.maximumf %848, %849 : vector<8x128xf32>
    %851 = vector.broadcast %171 : f32 to vector<8x128xf32>
    %852 = arith.mulf %538, %851 : vector<8x128xf32>
    %853 = vector.broadcast %177 : f32 to vector<8x128xf32>
    %854 = arith.mulf %571, %853 : vector<8x128xf32>
    %855 = arith.addf %852, %854 : vector<8x128xf32>
    %856 = vector.broadcast %183 : f32 to vector<8x128xf32>
    %857 = arith.mulf %604, %856 : vector<8x128xf32>
    %858 = arith.addf %855, %857 : vector<8x128xf32>
    %859 = vector.broadcast %189 : f32 to vector<8x128xf32>
    %860 = arith.mulf %637, %859 : vector<8x128xf32>
    %861 = arith.addf %858, %860 : vector<8x128xf32>
    %862 = vector.broadcast %195 : f32 to vector<8x128xf32>
    %863 = arith.mulf %670, %862 : vector<8x128xf32>
    %864 = arith.addf %861, %863 : vector<8x128xf32>
    %865 = vector.broadcast %201 : f32 to vector<8x128xf32>
    %866 = arith.mulf %703, %865 : vector<8x128xf32>
    %867 = arith.addf %864, %866 : vector<8x128xf32>
    %868 = vector.broadcast %207 : f32 to vector<8x128xf32>
    %869 = arith.mulf %736, %868 : vector<8x128xf32>
    %870 = arith.addf %867, %869 : vector<8x128xf32>
    %871 = vector.broadcast %213 : f32 to vector<8x128xf32>
    %872 = arith.mulf %769, %871 : vector<8x128xf32>
    %873 = arith.addf %870, %872 : vector<8x128xf32>
    %874 = vector.broadcast %219 : f32 to vector<8x128xf32>
    %875 = arith.addf %873, %874 : vector<8x128xf32>
    %cst_34 = arith.constant 0.000000e+00 : f32
    %876 = vector.broadcast %cst_34 : f32 to vector<8x128xf32>
    %877 = arith.maximumf %875, %876 : vector<8x128xf32>
    %878 = vector.broadcast %172 : f32 to vector<8x128xf32>
    %879 = arith.mulf %538, %878 : vector<8x128xf32>
    %880 = vector.broadcast %178 : f32 to vector<8x128xf32>
    %881 = arith.mulf %571, %880 : vector<8x128xf32>
    %882 = arith.addf %879, %881 : vector<8x128xf32>
    %883 = vector.broadcast %184 : f32 to vector<8x128xf32>
    %884 = arith.mulf %604, %883 : vector<8x128xf32>
    %885 = arith.addf %882, %884 : vector<8x128xf32>
    %886 = vector.broadcast %190 : f32 to vector<8x128xf32>
    %887 = arith.mulf %637, %886 : vector<8x128xf32>
    %888 = arith.addf %885, %887 : vector<8x128xf32>
    %889 = vector.broadcast %196 : f32 to vector<8x128xf32>
    %890 = arith.mulf %670, %889 : vector<8x128xf32>
    %891 = arith.addf %888, %890 : vector<8x128xf32>
    %892 = vector.broadcast %202 : f32 to vector<8x128xf32>
    %893 = arith.mulf %703, %892 : vector<8x128xf32>
    %894 = arith.addf %891, %893 : vector<8x128xf32>
    %895 = vector.broadcast %208 : f32 to vector<8x128xf32>
    %896 = arith.mulf %736, %895 : vector<8x128xf32>
    %897 = arith.addf %894, %896 : vector<8x128xf32>
    %898 = vector.broadcast %214 : f32 to vector<8x128xf32>
    %899 = arith.mulf %769, %898 : vector<8x128xf32>
    %900 = arith.addf %897, %899 : vector<8x128xf32>
    %901 = vector.broadcast %220 : f32 to vector<8x128xf32>
    %902 = arith.addf %900, %901 : vector<8x128xf32>
    %cst_35 = arith.constant 0.000000e+00 : f32
    %903 = vector.broadcast %cst_35 : f32 to vector<8x128xf32>
    %904 = arith.maximumf %902, %903 : vector<8x128xf32>
    %905 = vector.broadcast %173 : f32 to vector<8x128xf32>
    %906 = arith.mulf %538, %905 : vector<8x128xf32>
    %907 = vector.broadcast %179 : f32 to vector<8x128xf32>
    %908 = arith.mulf %571, %907 : vector<8x128xf32>
    %909 = arith.addf %906, %908 : vector<8x128xf32>
    %910 = vector.broadcast %185 : f32 to vector<8x128xf32>
    %911 = arith.mulf %604, %910 : vector<8x128xf32>
    %912 = arith.addf %909, %911 : vector<8x128xf32>
    %913 = vector.broadcast %191 : f32 to vector<8x128xf32>
    %914 = arith.mulf %637, %913 : vector<8x128xf32>
    %915 = arith.addf %912, %914 : vector<8x128xf32>
    %916 = vector.broadcast %197 : f32 to vector<8x128xf32>
    %917 = arith.mulf %670, %916 : vector<8x128xf32>
    %918 = arith.addf %915, %917 : vector<8x128xf32>
    %919 = vector.broadcast %203 : f32 to vector<8x128xf32>
    %920 = arith.mulf %703, %919 : vector<8x128xf32>
    %921 = arith.addf %918, %920 : vector<8x128xf32>
    %922 = vector.broadcast %209 : f32 to vector<8x128xf32>
    %923 = arith.mulf %736, %922 : vector<8x128xf32>
    %924 = arith.addf %921, %923 : vector<8x128xf32>
    %925 = vector.broadcast %215 : f32 to vector<8x128xf32>
    %926 = arith.mulf %769, %925 : vector<8x128xf32>
    %927 = arith.addf %924, %926 : vector<8x128xf32>
    %928 = vector.broadcast %221 : f32 to vector<8x128xf32>
    %929 = arith.addf %927, %928 : vector<8x128xf32>
    %cst_36 = arith.constant 0.000000e+00 : f32
    %930 = vector.broadcast %cst_36 : f32 to vector<8x128xf32>
    %931 = arith.maximumf %929, %930 : vector<8x128xf32>
    %932 = vector.broadcast %222 : f32 to vector<8x128xf32>
    %933 = arith.mulf %796, %932 : vector<8x128xf32>
    %934 = vector.broadcast %225 : f32 to vector<8x128xf32>
    %935 = arith.mulf %823, %934 : vector<8x128xf32>
    %936 = arith.addf %933, %935 : vector<8x128xf32>
    %937 = vector.broadcast %228 : f32 to vector<8x128xf32>
    %938 = arith.mulf %850, %937 : vector<8x128xf32>
    %939 = arith.addf %936, %938 : vector<8x128xf32>
    %940 = vector.broadcast %231 : f32 to vector<8x128xf32>
    %941 = arith.mulf %877, %940 : vector<8x128xf32>
    %942 = arith.addf %939, %941 : vector<8x128xf32>
    %943 = vector.broadcast %234 : f32 to vector<8x128xf32>
    %944 = arith.mulf %904, %943 : vector<8x128xf32>
    %945 = arith.addf %942, %944 : vector<8x128xf32>
    %946 = vector.broadcast %237 : f32 to vector<8x128xf32>
    %947 = arith.mulf %931, %946 : vector<8x128xf32>
    %948 = arith.addf %945, %947 : vector<8x128xf32>
    %949 = vector.broadcast %240 : f32 to vector<8x128xf32>
    %950 = arith.addf %948, %949 : vector<8x128xf32>
    %951 = vector.broadcast %223 : f32 to vector<8x128xf32>
    %952 = arith.mulf %796, %951 : vector<8x128xf32>
    %953 = vector.broadcast %226 : f32 to vector<8x128xf32>
    %954 = arith.mulf %823, %953 : vector<8x128xf32>
    %955 = arith.addf %952, %954 : vector<8x128xf32>
    %956 = vector.broadcast %229 : f32 to vector<8x128xf32>
    %957 = arith.mulf %850, %956 : vector<8x128xf32>
    %958 = arith.addf %955, %957 : vector<8x128xf32>
    %959 = vector.broadcast %232 : f32 to vector<8x128xf32>
    %960 = arith.mulf %877, %959 : vector<8x128xf32>
    %961 = arith.addf %958, %960 : vector<8x128xf32>
    %962 = vector.broadcast %235 : f32 to vector<8x128xf32>
    %963 = arith.mulf %904, %962 : vector<8x128xf32>
    %964 = arith.addf %961, %963 : vector<8x128xf32>
    %965 = vector.broadcast %238 : f32 to vector<8x128xf32>
    %966 = arith.mulf %931, %965 : vector<8x128xf32>
    %967 = arith.addf %964, %966 : vector<8x128xf32>
    %968 = vector.broadcast %241 : f32 to vector<8x128xf32>
    %969 = arith.addf %967, %968 : vector<8x128xf32>
    %970 = vector.broadcast %224 : f32 to vector<8x128xf32>
    %971 = arith.mulf %796, %970 : vector<8x128xf32>
    %972 = vector.broadcast %227 : f32 to vector<8x128xf32>
    %973 = arith.mulf %823, %972 : vector<8x128xf32>
    %974 = arith.addf %971, %973 : vector<8x128xf32>
    %975 = vector.broadcast %230 : f32 to vector<8x128xf32>
    %976 = arith.mulf %850, %975 : vector<8x128xf32>
    %977 = arith.addf %974, %976 : vector<8x128xf32>
    %978 = vector.broadcast %233 : f32 to vector<8x128xf32>
    %979 = arith.mulf %877, %978 : vector<8x128xf32>
    %980 = arith.addf %977, %979 : vector<8x128xf32>
    %981 = vector.broadcast %236 : f32 to vector<8x128xf32>
    %982 = arith.mulf %904, %981 : vector<8x128xf32>
    %983 = arith.addf %980, %982 : vector<8x128xf32>
    %984 = vector.broadcast %239 : f32 to vector<8x128xf32>
    %985 = arith.mulf %931, %984 : vector<8x128xf32>
    %986 = arith.addf %983, %985 : vector<8x128xf32>
    %987 = vector.broadcast %242 : f32 to vector<8x128xf32>
    %988 = arith.addf %986, %987 : vector<8x128xf32>
    %989 = arith.maximumf %950, %969 : vector<8x128xf32>
    %990 = arith.maximumf %989, %988 : vector<8x128xf32>
    %991 = arith.subf %950, %990 : vector<8x128xf32>
    %992 = math.exp %991 : vector<8x128xf32>
    %993 = arith.subf %969, %990 : vector<8x128xf32>
    %994 = math.exp %993 : vector<8x128xf32>
    %995 = arith.subf %988, %990 : vector<8x128xf32>
    %996 = math.exp %995 : vector<8x128xf32>
    %997 = arith.addf %992, %994 : vector<8x128xf32>
    %998 = arith.addf %997, %996 : vector<8x128xf32>
    %999 = tpu.reciprocal %998 : vector<8x128xf32> -> vector<8x128xf32>
    %1000 = arith.mulf %992, %999 : vector<8x128xf32>
    %c0_37 = arith.constant 0 : index
    %1001 = arith.index_cast %244 : i32 to index
    %c0_38 = arith.constant 0 : index
    %1002 = vector.load %arg3[%c0_37, %1001, %c0_38] : memref<3x8x128xf32, #tpu.memory_space<vmem>>, vector<1x8x128xf32>
    %1003 = vector.shape_cast %1002 : vector<1x8x128xf32> to vector<8x128xf32>
    %1004 = vector.shape_cast %1000 : vector<8x128xf32> to vector<1x8x128xf32>
    tpu.vector_store %arg3[%c0_37, %1001, %c0_38], %1004 {strides = array<i32>} : memref<3x8x128xf32, #tpu.memory_space<vmem>>, vector<1x8x128xf32>,
    %1005 = arith.mulf %994, %999 : vector<8x128xf32>
    %c1_39 = arith.constant 1 : index
    %1006 = arith.index_cast %244 : i32 to index
    %c0_40 = arith.constant 0 : index
    %1007 = vector.load %arg3[%c1_39, %1006, %c0_40] : memref<3x8x128xf32, #tpu.memory_space<vmem>>, vector<1x8x128xf32>
    %1008 = vector.shape_cast %1007 : vector<1x8x128xf32> to vector<8x128xf32>
    %1009 = vector.shape_cast %1005 : vector<8x128xf32> to vector<1x8x128xf32>
    tpu.vector_store %arg3[%c1_39, %1006, %c0_40], %1009 {strides = array<i32>} : memref<3x8x128xf32, #tpu.memory_space<vmem>>, vector<1x8x128xf32>,
    %1010 = arith.mulf %996, %999 : vector<8x128xf32>
    %c2_41 = arith.constant 2 : index
    %1011 = arith.index_cast %244 : i32 to index
    %c0_42 = arith.constant 0 : index
    %1012 = vector.load %arg3[%c2_41, %1011, %c0_42] : memref<3x8x128xf32, #tpu.memory_space<vmem>>, vector<1x8x128xf32>
    %1013 = vector.shape_cast %1012 : vector<1x8x128xf32> to vector<8x128xf32>
    %1014 = vector.shape_cast %1010 : vector<8x128xf32> to vector<1x8x128xf32>
    tpu.vector_store %arg3[%c2_41, %1011, %c0_42], %1014 {strides = array<i32>} : memref<3x8x128xf32, #tpu.memory_space<vmem>>, vector<1x8x128xf32>,
    %c1_i32 = arith.constant 1 : i32
    return
  }
  func.func @transform_0(%arg0: i32) -> i32 {
    %c0_i32 = arith.constant 0 : i32
    %c0_i32_0 = arith.constant 0 : i32
    return %c0_i32 : i32
  }
  func.func @transform_1(%arg0: i32) -> (i32, i32, i32) {
    %c0_i32 = arith.constant 0 : i32
    %c0_i32_0 = arith.constant 0 : i32
    %c0_i32_1 = arith.constant 0 : i32
    return %c0_i32, %arg0, %c0_i32_0 : i32, i32, i32
  }
  func.func @transform_2(%arg0: i32) -> (i32, i32, i32) {
    %c0_i32 = arith.constant 0 : i32
    %c0_i32_0 = arith.constant 0 : i32
    %c0_i32_1 = arith.constant 0 : i32
    return %c0_i32, %arg0, %c0_i32_0 : i32, i32, i32
  }
}

</mosaic_0001>

<llo_original>
// kernel: _forward_tiled.1
$region0: #{_forward_tiled.1}
  #allocation0 [shape = 'u32[]', space=smem, size = 0x4, offset = 0x4, fixed_abs, tag = 'smem constant byte address 0x4 - core index']
  #allocation1 [shape = 'u32[144,128]{1,0:T(1,128)}', space=vmem, size = 0x12000, scoped, tag = 'internal scratch']
  %s0 = inlined_call_operand.hbm [shape: f32[243], index: 0, kind: input, shape index: {}]
  %s1 = inlined_call_operand.hbm [shape: f32[7,8,128], index: 1, kind: input, shape index: {}]
  %s2 = inlined_call_operand.hbm [shape: f32[3,8,128], index: 2, kind: output, shape index: {}]
  %s3 = sld [smem:[#allocation0]]
  $region26: #{_forward_tiled.1} parent=0
    _
  %s5 = ssub.s32 1, %s3
  %s6 = scalar_select 0, %s5, %s3
  $region1: #{_forward_tiled.1} parent=0
    #allocation2 [shape = 'u8[1024]{0}', space=smem, size = 0x400, scoped, tag = 'input window, operand 0, single buffered']
    #allocation3 [shape = 's32[1]{0}', space=sflag, size = 0x4, scoped, tag = 'scoped memory for _forward_tiled.1']
    #allocation4 [shape = 's32[1]{0}', space=sflag, size = 0x4, scoped, tag = 'scoped memory for _forward_tiled.1']
    #allocation5 [shape = 's32[1]{0}', space=sflag, size = 0x4, scoped, tag = 'scoped memory for _forward_tiled.1']
    #allocation6 [shape = 'u8[28672]{0}', space=vmem, size = 0x7000, scoped, tag = 'input window, operand 1, single buffered']
    #allocation7 [shape = 'u8[12288]{0}', space=vmem, size = 0x3000, scoped, tag = 'output window, operand 0, single buffered']
    %7 = vsyncpa [#allocation5], 0
    %8 = vsyncpa [#allocation3], 0
    %9 = vsyncpa [#allocation4], 0
    // Predicated region
    $region2: #{_forward_tiled.1} parent=1 // pred_check
      _
    $region3: #{_forward_tiled.1} parent=1 // pred_check_branch
      %11 = sbr.rel (0) target = $region5
    $region4: #{_forward_tiled.1} parent=1 // pred_region
      %s13 = ssub.s32 32, 32
      %14 = vsyncadd [#allocation5], %s13
      %17 = dma.hbm_to_smem %s0, 32, [#allocation2], [#allocation5]
    $region5: #{_forward_tiled.1} parent=1 // pred_fallthru
      _
    // Predicated region
    $region6: #{_forward_tiled.1} parent=1 // pred_check
      _
    $region7: #{_forward_tiled.1} parent=1 // pred_check_branch
      %19 = sbr.rel (0) target = $region9
    $region8: #{_forward_tiled.1} parent=1 // pred_region
      %s21 = ssub.s32 896, 896
      %22 = vsyncadd [#allocation3], %s21
      %s23 = sshll.u32 [#allocation6], 4
      %s24 = int_to_ptr.vmem [resolvable:$true] %s23
      %29 = dma.hbm_to_vmem [thread:$0]  %s1, 896, %s24, [#allocation3], 128, 128, 8
    $region9: #{_forward_tiled.1} parent=1 // pred_fallthru
      _
    // Predicated region
    $region10: #{_forward_tiled.1} parent=1 // pred_check
      _
    $region11: #{_forward_tiled.1} parent=1 // pred_check_branch
      %31 = sbr.rel (0) target = $region13
    $region12: #{_forward_tiled.1} parent=1 // pred_region
      %32 = dma.done [#allocation5], 32
    $region13: #{_forward_tiled.1} parent=1 // pred_fallthru
      _
    // Predicated region
    $region14: #{_forward_tiled.1} parent=1 // pred_check
      _
    $region15: #{_forward_tiled.1} parent=1 // pred_check_branch
      %34 = sbr.rel (0) target = $region17
    $region16: #{_forward_tiled.1} parent=1 // pred_region
      %35 = dma.done [#allocation3], 896
    $region17: #{_forward_tiled.1} parent=1 // pred_fallthru
      _
    %36 = sfence
    %s37 = sld [smem:[#allocation2]]
    %s38 = sld [smem:[#allocation2 + $0x1]]
    %s39 = sld [smem:[#allocation2 + $0x2]]
    %s40 = sld [smem:[#allocation2 + $0x3]]
    %s41 = sld [smem:[#allocation2 + $0x4]]
    %s42 = sld [smem:[#allocation2 + $0x5]]
    %s43 = sld [smem:[#allocation2 + $0x6]]
    %s44 = sld [smem:[#allocation2 + $0x7]]
    %s45 = sld [smem:[#allocation2 + $0x8]]
    %s46 = sld [smem:[#allocation2 + $0x9]]
    %s47 = sld [smem:[#allocation2 + $0xa]]
    %s48 = sld [smem:[#allocation2 + $0xb]]
    %s49 = sld [smem:[#allocation2 + $0xc]]
    %s50 = sld [smem:[#allocation2 + $0xd]]
    %s51 = sld [smem:[#allocation2 + $0xe]]
    %s52 = sld [smem:[#allocation2 + $0xf]]
    %s53 = sld [smem:[#allocation2 + $0x10]]
    %s54 = sld [smem:[#allocation2 + $0x11]]
    %s55 = sld [smem:[#allocation2 + $0x12]]
    %s56 = sld [smem:[#allocation2 + $0x13]]
    %s57 = sld [smem:[#allocation2 + $0x14]]
    %s58 = sld [smem:[#allocation2 + $0x15]]
    %s59 = sld [smem:[#allocation2 + $0x16]]
    %s60 = sld [smem:[#allocation2 + $0x17]]
    %s61 = sld [smem:[#allocation2 + $0x18]]
    %s62 = sld [smem:[#allocation2 + $0x19]]
    %s63 = sld [smem:[#allocation2 + $0x1a]]
    %s64 = sld [smem:[#allocation2 + $0x1b]]
    %s65 = sld [smem:[#allocation2 + $0x1c]]
    %s66 = sld [smem:[#allocation2 + $0x1d]]
    %s67 = sld [smem:[#allocation2 + $0x1e]]
    %s68 = sld [smem:[#allocation2 + $0x1f]]
    %s69 = sld [smem:[#allocation2 + $0x20]]
    %s70 = sld [smem:[#allocation2 + $0x21]]
    %s71 = sld [smem:[#allocation2 + $0x22]]
    %s72 = sld [smem:[#allocation2 + $0x23]]
    %s73 = sld [smem:[#allocation2 + $0x24]]
    %s74 = sld [smem:[#allocation2 + $0x25]]
    %s75 = sld [smem:[#allocation2 + $0x26]]
    %s76 = sld [smem:[#allocation2 + $0x27]]
    %s77 = sld [smem:[#allocation2 + $0x28]]
    %s78 = sld [smem:[#allocation2 + $0x29]]
    %s79 = sld [smem:[#allocation2 + $0x2a]]
    %s80 = sld [smem:[#allocation2 + $0x2b]]
    %s81 = sld [smem:[#allocation2 + $0x2c]]
    %s82 = sld [smem:[#allocation2 + $0x2d]]
    %s83 = sld [smem:[#allocation2 + $0x2e]]
    %s84 = sld [smem:[#allocation2 + $0x2f]]
    %s85 = sld [smem:[#allocation2 + $0x30]]
    %s86 = sld [smem:[#allocation2 + $0x31]]
    %s87 = sld [smem:[#allocation2 + $0x32]]
    %s88 = sld [smem:[#allocation2 + $0x33]]
    %s89 = sld [smem:[#allocation2 + $0x34]]
    %s90 = sld [smem:[#allocation2 + $0x35]]
    %s91 = sld [smem:[#allocation2 + $0x36]]
    %s92 = sld [smem:[#allocation2 + $0x37]]
    %s93 = sld [smem:[#allocation2 + $0x38]]
    %s94 = sld [smem:[#allocation2 + $0x39]]
    %s95 = sld [smem:[#allocation2 + $0x3a]]
    %s96 = sld [smem:[#allocation2 + $0x3b]]
    %s97 = sld [smem:[#allocation2 + $0x3c]]
    %s98 = sld [smem:[#allocation2 + $0x3d]]
    %s99 = sld [smem:[#allocation2 + $0x3e]]
    %s100 = sld [smem:[#allocation2 + $0x3f]]
    %s101 = sld [smem:[#allocation2 + $0x40]]
    %s102 = sld [smem:[#allocation2 + $0x41]]
    %s103 = sld [smem:[#allocation2 + $0x42]]
    %s104 = sld [smem:[#allocation2 + $0x43]]
    %s105 = sld [smem:[#allocation2 + $0x44]]
    %s106 = sld [smem:[#allocation2 + $0x45]]
    %s107 = sld [smem:[#allocation2 + $0x46]]
    %s108 = sld [smem:[#allocation2 + $0x47]]
    %s109 = sld [smem:[#allocation2 + $0x48]]
    %s110 = sld [smem:[#allocation2 + $0x49]]
    %s111 = sld [smem:[#allocation2 + $0x4a]]
    %s112 = sld [smem:[#allocation2 + $0x4b]]
    %s113 = sld [smem:[#allocation2 + $0x4c]]
    %s114 = sld [smem:[#allocation2 + $0x4d]]
    %s115 = sld [smem:[#allocation2 + $0x4e]]
    %s116 = sld [smem:[#allocation2 + $0x4f]]
    %s117 = sld [smem:[#allocation2 + $0x50]]
    %s118 = sld [smem:[#allocation2 + $0x51]]
    %s119 = sld [smem:[#allocation2 + $0x52]]
    %s120 = sld [smem:[#allocation2 + $0x53]]
    %s121 = sld [smem:[#allocation2 + $0x54]]
    %s122 = sld [smem:[#allocation2 + $0x55]]
    %s123 = sld [smem:[#allocation2 + $0x56]]
    %s124 = sld [smem:[#allocation2 + $0x57]]
    %s125 = sld [smem:[#allocation2 + $0x58]]
    %s126 = sld [smem:[#allocation2 + $0x59]]
    %s127 = sld [smem:[#allocation2 + $0x5a]]
    %s128 = sld [smem:[#allocation2 + $0x5b]]
    %s129 = sld [smem:[#allocation2 + $0x5c]]
    %s130 = sld [smem:[#allocation2 + $0x5d]]
    %s131 = sld [smem:[#allocation2 + $0x5e]]
    %s132 = sld [smem:[#allocation2 + $0x5f]]
    %s133 = sld [smem:[#allocation2 + $0x60]]
    %s134 = sld [smem:[#allocation2 + $0x61]]
    %s135 = sld [smem:[#allocation2 + $0x62]]
    %s136 = sld [smem:[#allocation2 + $0x63]]
    %s137 = sld [smem:[#allocation2 + $0x64]]
    %s138 = sld [smem:[#allocation2 + $0x65]]
    %s139 = sld [smem:[#allocation2 + $0x66]]
    %s140 = sld [smem:[#allocation2 + $0x67]]
    %s141 = sld [smem:[#allocation2 + $0x68]]
    %s142 = sld [smem:[#allocation2 + $0x69]]
    %s143 = sld [smem:[#allocation2 + $0x6a]]
    %s144 = sld [smem:[#allocation2 + $0x6b]]
    %s145 = sld [smem:[#allocation2 + $0x6c]]
    %s146 = sld [smem:[#allocation2 + $0x6d]]
    %s147 = sld [smem:[#allocation2 + $0x6e]]
    %s148 = sld [smem:[#allocation2 + $0x6f]]
    %s149 = sld [smem:[#allocation2 + $0x70]]
    %s150 = sld [smem:[#allocation2 + $0x71]]
    %s151 = sld [smem:[#allocation2 + $0x72]]
    %s152 = sld [smem:[#allocation2 + $0x73]]
    %s153 = sld [smem:[#allocation2 + $0x74]]
    %s154 = sld [smem:[#allocation2 + $0x75]]
    %s155 = sld [smem:[#allocation2 + $0x76]]
    %s156 = sld [smem:[#allocation2 + $0x77]]
    %s157 = sld [smem:[#allocation2 + $0x78]]
    %s158 = sld [smem:[#allocation2 + $0x79]]
    %s159 = sld [smem:[#allocation2 + $0x7a]]
    %s160 = sld [smem:[#allocation2 + $0x7b]]
    %s161 = sld [smem:[#allocation2 + $0x7c]]
    %s162 = sld [smem:[#allocation2 + $0x7d]]
    %s163 = sld [smem:[#allocation2 + $0x7e]]
    %s164 = sld [smem:[#allocation2 + $0x7f]]
    %s165 = sld [smem:[#allocation2 + $0x80]]
    %s166 = sld [smem:[#allocation2 + $0x81]]
    %s167 = sld [smem:[#allocation2 + $0x82]]
    %s168 = sld [smem:[#allocation2 + $0x83]]
    %s169 = sld [smem:[#allocation2 + $0x84]]
    %s170 = sld [smem:[#allocation2 + $0x85]]
    %s171 = sld [smem:[#allocation2 + $0x86]]
    %s172 = sld [smem:[#allocation2 + $0x87]]
    %s173 = sld [smem:[#allocation2 + $0x88]]
    %s174 = sld [smem:[#allocation2 + $0x89]]
    %s175 = sld [smem:[#allocation2 + $0x8a]]
    %s176 = sld [smem:[#allocation2 + $0x8b]]
    %s177 = sld [smem:[#allocation2 + $0x8c]]
    %s178 = sld [smem:[#allocation2 + $0x8d]]
    %s179 = sld [smem:[#allocation2 + $0x8e]]
    %s180 = sld [smem:[#allocation2 + $0x8f]]
    %s181 = sld [smem:[#allocation2 + $0x90]]
    %s182 = sld [smem:[#allocation2 + $0x91]]
    %s183 = sld [smem:[#allocation2 + $0x92]]
    %s184 = sld [smem:[#allocation2 + $0x93]]
    %s185 = sld [smem:[#allocation2 + $0x94]]
    %s186 = sld [smem:[#allocation2 + $0x95]]
    %s187 = sld [smem:[#allocation2 + $0x96]]
    %s188 = sld [smem:[#allocation2 + $0x97]]
    %s189 = sld [smem:[#allocation2 + $0x98]]
    %s190 = sld [smem:[#allocation2 + $0x99]]
    %s191 = sld [smem:[#allocation2 + $0x9a]]
    %s192 = sld [smem:[#allocation2 + $0x9b]]
    %s193 = sld [smem:[#allocation2 + $0x9c]]
    %s194 = sld [smem:[#allocation2 + $0x9d]]
    %s195 = sld [smem:[#allocation2 + $0x9e]]
    %s196 = sld [smem:[#allocation2 + $0x9f]]
    %s197 = sld [smem:[#allocation2 + $0xa0]]
    %s198 = sld [smem:[#allocation2 + $0xa1]]
    %s199 = sld [smem:[#allocation2 + $0xa2]]
    %s200 = sld [smem:[#allocation2 + $0xa3]]
    %s201 = sld [smem:[#allocation2 + $0xa4]]
    %s202 = sld [smem:[#allocation2 + $0xa5]]
    %s203 = sld [smem:[#allocation2 + $0xa6]]
    %s204 = sld [smem:[#allocation2 + $0xa7]]
    %s205 = sld [smem:[#allocation2 + $0xa8]]
    %s206 = sld [smem:[#allocation2 + $0xa9]]
    %s207 = sld [smem:[#allocation2 + $0xaa]]
    %s208 = sld [smem:[#allocation2 + $0xab]]
    %s209 = sld [smem:[#allocation2 + $0xac]]
    %s210 = sld [smem:[#allocation2 + $0xad]]
    %s211 = sld [smem:[#allocation2 + $0xae]]
    %s212 = sld [smem:[#allocation2 + $0xaf]]
    %s213 = sld [smem:[#allocation2 + $0xb0]]
    %s214 = sld [smem:[#allocation2 + $0xb1]]
    %s215 = sld [smem:[#allocation2 + $0xb2]]
    %s216 = sld [smem:[#allocation2 + $0xb3]]
    %s217 = sld [smem:[#allocation2 + $0xb4]]
    %s218 = sld [smem:[#allocation2 + $0xb5]]
    %s219 = sld [smem:[#allocation2 + $0xb6]]
    %s220 = sld [smem:[#allocation2 + $0xb7]]
    %s221 = sld [smem:[#allocation2 + $0xb8]]
    %s222 = sld [smem:[#allocation2 + $0xb9]]
    %s223 = sld [smem:[#allocation2 + $0xba]]
    %s224 = sld [smem:[#allocation2 + $0xbb]]
    %s225 = sld [smem:[#allocation2 + $0xbc]]
    %s226 = sld [smem:[#allocation2 + $0xbd]]
    %s227 = sld [smem:[#allocation2 + $0xbe]]
    %s228 = sld [smem:[#allocation2 + $0xbf]]
    %s229 = sld [smem:[#allocation2 + $0xc0]]
    %s230 = sld [smem:[#allocation2 + $0xc1]]
    %s231 = sld [smem:[#allocation2 + $0xc2]]
    %s232 = sld [smem:[#allocation2 + $0xc3]]
    %s233 = sld [smem:[#allocation2 + $0xc4]]
    %s234 = sld [smem:[#allocation2 + $0xc5]]
    %s235 = sld [smem:[#allocation2 + $0xc6]]
    %s236 = sld [smem:[#allocation2 + $0xc7]]
    %s237 = sld [smem:[#allocation2 + $0xc8]]
    %s238 = sld [smem:[#allocation2 + $0xc9]]
    %s239 = sld [smem:[#allocation2 + $0xca]]
    %s240 = sld [smem:[#allocation2 + $0xcb]]
    %s241 = sld [smem:[#allocation2 + $0xcc]]
    %s242 = sld [smem:[#allocation2 + $0xcd]]
    %s243 = sld [smem:[#allocation2 + $0xce]]
    %s244 = sld [smem:[#allocation2 + $0xcf]]
    %s245 = sld [smem:[#allocation2 + $0xd0]]
    %s246 = sld [smem:[#allocation2 + $0xd1]]
    %s247 = sld [smem:[#allocation2 + $0xd2]]
    %s248 = sld [smem:[#allocation2 + $0xd3]]
    %s249 = sld [smem:[#allocation2 + $0xd4]]
    %s250 = sld [smem:[#allocation2 + $0xd5]]
    %s251 = sld [smem:[#allocation2 + $0xd6]]
    %s252 = sld [smem:[#allocation2 + $0xd7]]
    %s253 = sld [smem:[#allocation2 + $0xd8]]
    %s254 = sld [smem:[#allocation2 + $0xd9]]
    %s255 = sld [smem:[#allocation2 + $0xda]]
    %s256 = sld [smem:[#allocation2 + $0xdb]]
    %s257 = sld [smem:[#allocation2 + $0xdc]]
    %s258 = sld [smem:[#allocation2 + $0xdd]]
    %s259 = sld [smem:[#allocation2 + $0xde]]
    %s260 = sld [smem:[#allocation2 + $0xdf]]
    %s261 = sld [smem:[#allocation2 + $0xe0]]
    %s262 = sld [smem:[#allocation2 + $0xe1]]
    %s263 = sld [smem:[#allocation2 + $0xe2]]
    %s264 = sld [smem:[#allocation2 + $0xe3]]
    %s265 = sld [smem:[#allocation2 + $0xe4]]
    %s266 = sld [smem:[#allocation2 + $0xe5]]
    %s267 = sld [smem:[#allocation2 + $0xe6]]
    %s268 = sld [smem:[#allocation2 + $0xe7]]
    %s269 = sld [smem:[#allocation2 + $0xe8]]
    %s270 = sld [smem:[#allocation2 + $0xe9]]
    %s271 = sld [smem:[#allocation2 + $0xea]]
    %s272 = sld [smem:[#allocation2 + $0xeb]]
    %s273 = sld [smem:[#allocation2 + $0xec]]
    %s274 = sld [smem:[#allocation2 + $0xed]]
    %s275 = sld [smem:[#allocation2 + $0xee]]
    %s276 = sld [smem:[#allocation2 + $0xef]]
    %s277 = sld [smem:[#allocation2 + $0xf0]]
    %s278 = sld [smem:[#allocation2 + $0xf1]]
    %s279 = sld [smem:[#allocation2 + $0xf2]]
    %v280 = vld [vmem:[#allocation6] sm:$0xff]
    %s281 = sadd.s32 0, 8
    %s282 = scalar_lea.vmem [#allocation6], %s281
    %v283 = vld [vmem:[%s282] sm:$0xff]
    %s284 = sadd.s32 0, 16
    %s285 = scalar_lea.vmem [#allocation6], %s284
    %v286 = vld [vmem:[%s285] sm:$0xff]
    %s287 = sadd.s32 0, 24
    %s288 = scalar_lea.vmem [#allocation6], %s287
    %v289 = vld [vmem:[%s288] sm:$0xff]
    %s290 = sadd.s32 0, 32
    %s291 = scalar_lea.vmem [#allocation6], %s290
    %v292 = vld [vmem:[%s291] sm:$0xff]
    %s293 = sadd.s32 0, 40
    %s294 = scalar_lea.vmem [#allocation6], %s293
    %v295 = vld [vmem:[%s294] sm:$0xff]
    %s296 = sadd.s32 0, 48
    %s297 = scalar_lea.vmem [#allocation6], %s296
    %v298 = vld [vmem:[%s297] sm:$0xff]
    %v299 = vstv %s37
    %v300 = vmul.f32 %v280, %v299
    %v301 = vstv %s47
    %v302 = vmul.f32 %v283, %v301
    %v303 = vadd.f32 %v300, %v302
    %v304 = vstv %s57
    %v305 = vmul.f32 %v286, %v304
    %v306 = vadd.f32 %v303, %v305
    %v307 = vstv %s67
    %v308 = vmul.f32 %v289, %v307
    %v309 = vadd.f32 %v306, %v308
    %v310 = vstv %s77
    %v311 = vmul.f32 %v292, %v310
    %v312 = vadd.f32 %v309, %v311
    %v313 = vstv %s87
    %v314 = vmul.f32 %v295, %v313
    %v315 = vadd.f32 %v312, %v314
    %v316 = vstv %s97
    %v317 = vmul.f32 %v298, %v316
    %v318 = vadd.f32 %v315, %v317
    %v319 = vstv %s107
    %v320 = vadd.f32 %v318, %v319
    %v321 = vmax.f32 %v320, 0.0
    %v322 = vstv %s38
    %v323 = vmul.f32 %v280, %v322
    %v324 = vstv %s48
    %v325 = vmul.f32 %v283, %v324
    %v326 = vadd.f32 %v323, %v325
    %v327 = vstv %s58
    %v328 = vmul.f32 %v286, %v327
    %v329 = vadd.f32 %v326, %v328
    %v330 = vstv %s68
    %v331 = vmul.f32 %v289, %v330
    %v332 = vadd.f32 %v329, %v331
    %v333 = vstv %s78
    %v334 = vmul.f32 %v292, %v333
    %v335 = vadd.f32 %v332, %v334
    %v336 = vstv %s88
    %v337 = vmul.f32 %v295, %v336
    %v338 = vadd.f32 %v335, %v337
    %v339 = vstv %s98
    %v340 = vmul.f32 %v298, %v339
    %v341 = vadd.f32 %v338, %v340
    %v342 = vstv %s108
    %v343 = vadd.f32 %v341, %v342
    %v344 = vmax.f32 %v343, 0.0
    %v345 = vstv %s39
    %v346 = vmul.f32 %v280, %v345
    %v347 = vstv %s49
    %v348 = vmul.f32 %v283, %v347
    %v349 = vadd.f32 %v346, %v348
    %v350 = vstv %s59
    %v351 = vmul.f32 %v286, %v350
    %v352 = vadd.f32 %v349, %v351
    %v353 = vstv %s69
    %v354 = vmul.f32 %v289, %v353
    %v355 = vadd.f32 %v352, %v354
    %v356 = vstv %s79
    %v357 = vmul.f32 %v292, %v356
    %v358 = vadd.f32 %v355, %v357
    %v359 = vstv %s89
    %v360 = vmul.f32 %v295, %v359
    %v361 = vadd.f32 %v358, %v360
    %v362 = vstv %s99
    %v363 = vmul.f32 %v298, %v362
    %v364 = vadd.f32 %v361, %v363
    %v365 = vstv %s109
    %v366 = vadd.f32 %v364, %v365
    %v367 = vmax.f32 %v366, 0.0
    %v368 = vstv %s40
    %v369 = vmul.f32 %v280, %v368
    %v370 = vstv %s50
    %v371 = vmul.f32 %v283, %v370
    %v372 = vadd.f32 %v369, %v371
    %v373 = vstv %s60
    %v374 = vmul.f32 %v286, %v373
    %v375 = vadd.f32 %v372, %v374
    %v376 = vstv %s70
    %v377 = vmul.f32 %v289, %v376
    %v378 = vadd.f32 %v375, %v377
    %v379 = vstv %s80
    %v380 = vmul.f32 %v292, %v379
    %v381 = vadd.f32 %v378, %v380
    %v382 = vstv %s90
    %v383 = vmul.f32 %v295, %v382
    %v384 = vadd.f32 %v381, %v383
    %v385 = vstv %s100
    %v386 = vmul.f32 %v298, %v385
    %v387 = vadd.f32 %v384, %v386
    %v388 = vstv %s110
    %v389 = vadd.f32 %v387, %v388
    %v390 = vmax.f32 %v389, 0.0
    %v391 = vstv %s41
    %v392 = vmul.f32 %v280, %v391
    %v393 = vstv %s51
    %v394 = vmul.f32 %v283, %v393
    %v395 = vadd.f32 %v392, %v394
    %v396 = vstv %s61
    %v397 = vmul.f32 %v286, %v396
    %v398 = vadd.f32 %v395, %v397
    %v399 = vstv %s71
    %v400 = vmul.f32 %v289, %v399
    %v401 = vadd.f32 %v398, %v400
    %v402 = vstv %s81
    %v403 = vmul.f32 %v292, %v402
    %v404 = vadd.f32 %v401, %v403
    %v405 = vstv %s91
    %v406 = vmul.f32 %v295, %v405
    %v407 = vadd.f32 %v404, %v406
    %v408 = vstv %s101
    %v409 = vmul.f32 %v298, %v408
    %v410 = vadd.f32 %v407, %v409
    %v411 = vstv %s111
    %v412 = vadd.f32 %v410, %v411
    %v413 = vmax.f32 %v412, 0.0
    %v414 = vstv %s42
    %v415 = vmul.f32 %v280, %v414
    %v416 = vstv %s52
    %v417 = vmul.f32 %v283, %v416
    %v418 = vadd.f32 %v415, %v417
    %v419 = vstv %s62
    %v420 = vmul.f32 %v286, %v419
    %v421 = vadd.f32 %v418, %v420
    %v422 = vstv %s72
    %v423 = vmul.f32 %v289, %v422
    %v424 = vadd.f32 %v421, %v423
    %v425 = vstv %s82
    %v426 = vmul.f32 %v292, %v425
    %v427 = vadd.f32 %v424, %v426
    %v428 = vstv %s92
    %v429 = vmul.f32 %v295, %v428
    %v430 = vadd.f32 %v427, %v429
    %v431 = vstv %s102
    %v432 = vmul.f32 %v298, %v431
    %v433 = vadd.f32 %v430, %v432
    %v434 = vstv %s112
    %v435 = vadd.f32 %v433, %v434
    %v436 = vmax.f32 %v435, 0.0
    %v437 = vstv %s43
    %v438 = vmul.f32 %v280, %v437
    %v439 = vstv %s53
    %v440 = vmul.f32 %v283, %v439
    %v441 = vadd.f32 %v438, %v440
    %v442 = vstv %s63
    %v443 = vmul.f32 %v286, %v442
    %v444 = vadd.f32 %v441, %v443
    %v445 = vstv %s73
    %v446 = vmul.f32 %v289, %v445
    %v447 = vadd.f32 %v444, %v446
    %v448 = vstv %s83
    %v449 = vmul.f32 %v292, %v448
    %v450 = vadd.f32 %v447, %v449
    %v451 = vstv %s93
    %v452 = vmul.f32 %v295, %v451
    %v453 = vadd.f32 %v450, %v452
    %v454 = vstv %s103
    %v455 = vmul.f32 %v298, %v454
    %v456 = vadd.f32 %v453, %v455
    %v457 = vstv %s113
    %v458 = vadd.f32 %v456, %v457
    %v459 = vmax.f32 %v458, 0.0
    %v460 = vstv %s44
    %v461 = vmul.f32 %v280, %v460
    %v462 = vstv %s54
    %v463 = vmul.f32 %v283, %v462
    %v464 = vadd.f32 %v461, %v463
    %v465 = vstv %s64
    %v466 = vmul.f32 %v286, %v465
    %v467 = vadd.f32 %v464, %v466
    %v468 = vstv %s74
    %v469 = vmul.f32 %v289, %v468
    %v470 = vadd.f32 %v467, %v469
    %v471 = vstv %s84
    %v472 = vmul.f32 %v292, %v471
    %v473 = vadd.f32 %v470, %v472
    %v474 = vstv %s94
    %v475 = vmul.f32 %v295, %v474
    %v476 = vadd.f32 %v473, %v475
    %v477 = vstv %s104
    %v478 = vmul.f32 %v298, %v477
    %v479 = vadd.f32 %v476, %v478
    %v480 = vstv %s114
    %v481 = vadd.f32 %v479, %v480
    %v482 = vmax.f32 %v481, 0.0
    %v483 = vstv %s45
    %v484 = vmul.f32 %v280, %v483
    %v485 = vstv %s55
    %v486 = vmul.f32 %v283, %v485
    %v487 = vadd.f32 %v484, %v486
    %v488 = vstv %s65
    %v489 = vmul.f32 %v286, %v488
    %v490 = vadd.f32 %v487, %v489
    %v491 = vstv %s75
    %v492 = vmul.f32 %v289, %v491
    %v493 = vadd.f32 %v490, %v492
    %v494 = vstv %s85
    %v495 = vmul.f32 %v292, %v494
    %v496 = vadd.f32 %v493, %v495
    %v497 = vstv %s95
    %v498 = vmul.f32 %v295, %v497
    %v499 = vadd.f32 %v496, %v498
    %v500 = vstv %s105
    %v501 = vmul.f32 %v298, %v500
    %v502 = vadd.f32 %v499, %v501
    %v503 = vstv %s115
    %v504 = vadd.f32 %v502, %v503
    %v505 = vmax.f32 %v504, 0.0
    %v506 = vstv %s46
    %v507 = vmul.f32 %v280, %v506
    %v508 = vstv %s56
    %v509 = vmul.f32 %v283, %v508
    %v510 = vadd.f32 %v507, %v509
    %v511 = vstv %s66
    %v512 = vmul.f32 %v286, %v511
    %v513 = vadd.f32 %v510, %v512
    %v514 = vstv %s76
    %v515 = vmul.f32 %v289, %v514
    %v516 = vadd.f32 %v513, %v515
    %v517 = vstv %s86
    %v518 = vmul.f32 %v292, %v517
    %v519 = vadd.f32 %v516, %v518
    %v520 = vstv %s96
    %v521 = vmul.f32 %v295, %v520
    %v522 = vadd.f32 %v519, %v521
    %v523 = vstv %s106
    %v524 = vmul.f32 %v298, %v523
    %v525 = vadd.f32 %v522, %v524
    %v526 = vstv %s116
    %v527 = vadd.f32 %v525, %v526
    %v528 = vmax.f32 %v527, 0.0
    %v529 = vstv %s117
    %v530 = vmul.f32 %v321, %v529
    %v531 = vstv %s125
    %v532 = vmul.f32 %v344, %v531
    %v533 = vadd.f32 %v530, %v532
    %v534 = vstv %s133
    %v535 = vmul.f32 %v367, %v534
    %v536 = vadd.f32 %v533, %v535
    %v537 = vstv %s141
    %v538 = vmul.f32 %v390, %v537
    %v539 = vadd.f32 %v536, %v538
    %v540 = vstv %s149
    %v541 = vmul.f32 %v413, %v540
    %v542 = vadd.f32 %v539, %v541
    %v543 = vstv %s157
    %v544 = vmul.f32 %v436, %v543
    %v545 = vadd.f32 %v542, %v544
    %v546 = vstv %s165
    %v547 = vmul.f32 %v459, %v546
    %v548 = vadd.f32 %v545, %v547
    %v549 = vstv %s173
    %v550 = vmul.f32 %v482, %v549
    %v551 = vadd.f32 %v548, %v550
    %v552 = vstv %s181
    %v553 = vmul.f32 %v505, %v552
    %v554 = vadd.f32 %v551, %v553
    %v555 = vstv %s189
    %v556 = vmul.f32 %v528, %v555
    %v557 = vadd.f32 %v554, %v556
    %v558 = vstv %s197
    %v559 = vadd.f32 %v557, %v558
    %v560 = vmax.f32 %v559, 0.0
    %v561 = vstv %s118
    %v562 = vmul.f32 %v321, %v561
    %v563 = vstv %s126
    %v564 = vmul.f32 %v344, %v563
    %v565 = vadd.f32 %v562, %v564
    %v566 = vstv %s134
    %v567 = vmul.f32 %v367, %v566
    %v568 = vadd.f32 %v565, %v567
    %v569 = vstv %s142
    %v570 = vmul.f32 %v390, %v569
    %v571 = vadd.f32 %v568, %v570
    %v572 = vstv %s150
    %v573 = vmul.f32 %v413, %v572
    %v574 = vadd.f32 %v571, %v573
    %v575 = vstv %s158
    %v576 = vmul.f32 %v436, %v575
    %v577 = vadd.f32 %v574, %v576
    %v578 = vstv %s166
    %v579 = vmul.f32 %v459, %v578
    %v580 = vadd.f32 %v577, %v579
    %v581 = vstv %s174
    %v582 = vmul.f32 %v482, %v581
    %v583 = vadd.f32 %v580, %v582
    %v584 = vstv %s182
    %v585 = vmul.f32 %v505, %v584
    %v586 = vadd.f32 %v583, %v585
    %v587 = vstv %s190
    %v588 = vmul.f32 %v528, %v587
    %v589 = vadd.f32 %v586, %v588
    %v590 = vstv %s198
    %v591 = vadd.f32 %v589, %v590
    %v592 = vmax.f32 %v591, 0.0
    %v593 = vstv %s119
    %v594 = vmul.f32 %v321, %v593
    %v595 = vstv %s127
    %v596 = vmul.f32 %v344, %v595
    %v597 = vadd.f32 %v594, %v596
    %v598 = vstv %s135
    %v599 = vmul.f32 %v367, %v598
    %v600 = vadd.f32 %v597, %v599
    %v601 = vstv %s143
    %v602 = vmul.f32 %v390, %v601
    %v603 = vadd.f32 %v600, %v602
    %v604 = vstv %s151
    %v605 = vmul.f32 %v413, %v604
    %v606 = vadd.f32 %v603, %v605
    %v607 = vstv %s159
    %v608 = vmul.f32 %v436, %v607
    %v609 = vadd.f32 %v606, %v608
    %v610 = vstv %s167
    %v611 = vmul.f32 %v459, %v610
    %v612 = vadd.f32 %v609, %v611
    %v613 = vstv %s175
    %v614 = vmul.f32 %v482, %v613
    %v615 = vadd.f32 %v612, %v614
    %v616 = vstv %s183
    %v617 = vmul.f32 %v505, %v616
    %v618 = vadd.f32 %v615, %v617
    %v619 = vstv %s191
    %v620 = vmul.f32 %v528, %v619
    %v621 = vadd.f32 %v618, %v620
    %v622 = vstv %s199
    %v623 = vadd.f32 %v621, %v622
    %v624 = vmax.f32 %v623, 0.0
    %v625 = vstv %s120
    %v626 = vmul.f32 %v321, %v625
    %v627 = vstv %s128
    %v628 = vmul.f32 %v344, %v627
    %v629 = vadd.f32 %v626, %v628
    %v630 = vstv %s136
    %v631 = vmul.f32 %v367, %v630
    %v632 = vadd.f32 %v629, %v631
    %v633 = vstv %s144
    %v634 = vmul.f32 %v390, %v633
    %v635 = vadd.f32 %v632, %v634
    %v636 = vstv %s152
    %v637 = vmul.f32 %v413, %v636
    %v638 = vadd.f32 %v635, %v637
    %v639 = vstv %s160
    %v640 = vmul.f32 %v436, %v639
    %v641 = vadd.f32 %v638, %v640
    %v642 = vstv %s168
    %v643 = vmul.f32 %v459, %v642
    %v644 = vadd.f32 %v641, %v643
    %v645 = vstv %s176
    %v646 = vmul.f32 %v482, %v645
    %v647 = vadd.f32 %v644, %v646
    %v648 = vstv %s184
    %v649 = vmul.f32 %v505, %v648
    %v650 = vadd.f32 %v647, %v649
    %v651 = vstv %s192
    %v652 = vmul.f32 %v528, %v651
    %v653 = vadd.f32 %v650, %v652
    %v654 = vstv %s200
    %v655 = vadd.f32 %v653, %v654
    %v656 = vmax.f32 %v655, 0.0
    %v657 = vstv %s121
    %v658 = vmul.f32 %v321, %v657
    %v659 = vstv %s129
    %v660 = vmul.f32 %v344, %v659
    %v661 = vadd.f32 %v658, %v660
    %v662 = vstv %s137
    %v663 = vmul.f32 %v367, %v662
    %v664 = vadd.f32 %v661, %v663
    %v665 = vstv %s145
    %v666 = vmul.f32 %v390, %v665
    %v667 = vadd.f32 %v664, %v666
    %v668 = vstv %s153
    %v669 = vmul.f32 %v413, %v668
    %v670 = vadd.f32 %v667, %v669
    %v671 = vstv %s161
    %v672 = vmul.f32 %v436, %v671
    %v673 = vadd.f32 %v670, %v672
    %v674 = vstv %s169
    %v675 = vmul.f32 %v459, %v674
    %v676 = vadd.f32 %v673, %v675
    %v677 = vstv %s177
    %v678 = vmul.f32 %v482, %v677
    %v679 = vadd.f32 %v676, %v678
    %v680 = vstv %s185
    %v681 = vmul.f32 %v505, %v680
    %v682 = vadd.f32 %v679, %v681
    %v683 = vstv %s193
    %v684 = vmul.f32 %v528, %v683
    %v685 = vadd.f32 %v682, %v684
    %v686 = vstv %s201
    %v687 = vadd.f32 %v685, %v686
    %v688 = vmax.f32 %v687, 0.0
    %v689 = vstv %s122
    %v690 = vmul.f32 %v321, %v689
    %v691 = vstv %s130
    %v692 = vmul.f32 %v344, %v691
    %v693 = vadd.f32 %v690, %v692
    %v694 = vstv %s138
    %v695 = vmul.f32 %v367, %v694
    %v696 = vadd.f32 %v693, %v695
    %v697 = vstv %s146
    %v698 = vmul.f32 %v390, %v697
    %v699 = vadd.f32 %v696, %v698
    %v700 = vstv %s154
    %v701 = vmul.f32 %v413, %v700
    %v702 = vadd.f32 %v699, %v701
    %v703 = vstv %s162
    %v704 = vmul.f32 %v436, %v703
    %v705 = vadd.f32 %v702, %v704
    %v706 = vstv %s170
    %v707 = vmul.f32 %v459, %v706
    %v708 = vadd.f32 %v705, %v707
    %v709 = vstv %s178
    %v710 = vmul.f32 %v482, %v709
    %v711 = vadd.f32 %v708, %v710
    %v712 = vstv %s186
    %v713 = vmul.f32 %v505, %v712
    %v714 = vadd.f32 %v711, %v713
    %v715 = vstv %s194
    %v716 = vmul.f32 %v528, %v715
    %v717 = vadd.f32 %v714, %v716
    %v718 = vstv %s202
    %v719 = vadd.f32 %v717, %v718
    %v720 = vmax.f32 %v719, 0.0
    %v721 = vstv %s123
    %v722 = vmul.f32 %v321, %v721
    %v723 = vstv %s131
    %v724 = vmul.f32 %v344, %v723
    %v725 = vadd.f32 %v722, %v724
    %v726 = vstv %s139
    %v727 = vmul.f32 %v367, %v726
    %v728 = vadd.f32 %v725, %v727
    %v729 = vstv %s147
    %v730 = vmul.f32 %v390, %v729
    %v731 = vadd.f32 %v728, %v730
    %v732 = vstv %s155
    %v733 = vmul.f32 %v413, %v732
    %v734 = vadd.f32 %v731, %v733
    %v735 = vstv %s163
    %v736 = vmul.f32 %v436, %v735
    %v737 = vadd.f32 %v734, %v736
    %v738 = vstv %s171
    %v739 = vmul.f32 %v459, %v738
    %v740 = vadd.f32 %v737, %v739
    %v741 = vstv %s179
    %v742 = vmul.f32 %v482, %v741
    %v743 = vadd.f32 %v740, %v742
    %v744 = vstv %s187
    %v745 = vmul.f32 %v505, %v744
    %v746 = vadd.f32 %v743, %v745
    %v747 = vstv %s195
    %v748 = vmul.f32 %v528, %v747
    %v749 = vadd.f32 %v746, %v748
    %v750 = vstv %s203
    %v751 = vadd.f32 %v749, %v750
    %v752 = vmax.f32 %v751, 0.0
    %v753 = vstv %s124
    %v754 = vmul.f32 %v321, %v753
    %v755 = vstv %s132
    %v756 = vmul.f32 %v344, %v755
    %v757 = vadd.f32 %v754, %v756
    %v758 = vstv %s140
    %v759 = vmul.f32 %v367, %v758
    %v760 = vadd.f32 %v757, %v759
    %v761 = vstv %s148
    %v762 = vmul.f32 %v390, %v761
    %v763 = vadd.f32 %v760, %v762
    %v764 = vstv %s156
    %v765 = vmul.f32 %v413, %v764
    %v766 = vadd.f32 %v763, %v765
    %v767 = vstv %s164
    %v768 = vmul.f32 %v436, %v767
    %v769 = vadd.f32 %v766, %v768
    %v770 = vstv %s172
    %v771 = vmul.f32 %v459, %v770
    %v772 = vadd.f32 %v769, %v771
    %v773 = vstv %s180
    %v774 = vmul.f32 %v482, %v773
    %v775 = vadd.f32 %v772, %v774
    %v776 = vstv %s188
    %v777 = vmul.f32 %v505, %v776
    %v778 = vadd.f32 %v775, %v777
    %v779 = vstv %s196
    %v780 = vmul.f32 %v528, %v779
    %v781 = vadd.f32 %v778, %v780
    %v782 = vstv %s204
    %v783 = vadd.f32 %v781, %v782
    %v784 = vmax.f32 %v783, 0.0
    %v785 = vstv %s205
    %v786 = vmul.f32 %v560, %v785
    %v787 = vstv %s211
    %v788 = vmul.f32 %v592, %v787
    %v789 = vadd.f32 %v786, %v788
    %v790 = vstv %s217
    %v791 = vmul.f32 %v624, %v790
    %v792 = vadd.f32 %v789, %v791
    %v793 = vstv %s223
    %v794 = vmul.f32 %v656, %v793
    %v795 = vadd.f32 %v792, %v794
    %v796 = vstv %s229
    %v797 = vmul.f32 %v688, %v796
    %v798 = vadd.f32 %v795, %v797
    %v799 = vstv %s235
    %v800 = vmul.f32 %v720, %v799
    %v801 = vadd.f32 %v798, %v800
    %v802 = vstv %s241
    %v803 = vmul.f32 %v752, %v802
    %v804 = vadd.f32 %v801, %v803
    %v805 = vstv %s247
    %v806 = vmul.f32 %v784, %v805
    %v807 = vadd.f32 %v804, %v806
    %v808 = vstv %s253
    %v809 = vadd.f32 %v807, %v808
    %v810 = vmax.f32 %v809, 0.0
    %v811 = vstv %s206
    %v812 = vmul.f32 %v560, %v811
    %v813 = vstv %s212
    %v814 = vmul.f32 %v592, %v813
    %v815 = vadd.f32 %v812, %v814
    %v816 = vstv %s218
    %v817 = vmul.f32 %v624, %v816
    %v818 = vadd.f32 %v815, %v817
    %v819 = vstv %s224
    %v820 = vmul.f32 %v656, %v819
    %v821 = vadd.f32 %v818, %v820
    %v822 = vstv %s230
    %v823 = vmul.f32 %v688, %v822
    %v824 = vadd.f32 %v821, %v823
    %v825 = vstv %s236
    %v826 = vmul.f32 %v720, %v825
    %v827 = vadd.f32 %v824, %v826
    %v828 = vstv %s242
    %v829 = vmul.f32 %v752, %v828
    %v830 = vadd.f32 %v827, %v829
    %v831 = vstv %s248
    %v832 = vmul.f32 %v784, %v831
    %v833 = vadd.f32 %v830, %v832
    %v834 = vstv %s254
    %v835 = vadd.f32 %v833, %v834
    %v836 = vmax.f32 %v835, 0.0
    %v837 = vstv %s207
    %v838 = vmul.f32 %v560, %v837
    %v839 = vstv %s213
    %v840 = vmul.f32 %v592, %v839
    %v841 = vadd.f32 %v838, %v840
    %v842 = vstv %s219
    %v843 = vmul.f32 %v624, %v842
    %v844 = vadd.f32 %v841, %v843
    %v845 = vstv %s225
    %v846 = vmul.f32 %v656, %v845
    %v847 = vadd.f32 %v844, %v846
    %v848 = vstv %s231
    %v849 = vmul.f32 %v688, %v848
    %v850 = vadd.f32 %v847, %v849
    %v851 = vstv %s237
    %v852 = vmul.f32 %v720, %v851
    %v853 = vadd.f32 %v850, %v852
    %v854 = vstv %s243
    %v855 = vmul.f32 %v752, %v854
    %v856 = vadd.f32 %v853, %v855
    %v857 = vstv %s249
    %v858 = vmul.f32 %v784, %v857
    %v859 = vadd.f32 %v856, %v858
    %v860 = vstv %s255
    %v861 = vadd.f32 %v859, %v860
    %v862 = vmax.f32 %v861, 0.0
    %v863 = vstv %s208
    %v864 = vmul.f32 %v560, %v863
    %v865 = vstv %s214
    %v866 = vmul.f32 %v592, %v865
    %v867 = vadd.f32 %v864, %v866
    %v868 = vstv %s220
    %v869 = vmul.f32 %v624, %v868
    %v870 = vadd.f32 %v867, %v869
    %v871 = vstv %s226
    %v872 = vmul.f32 %v656, %v871
    %v873 = vadd.f32 %v870, %v872
    %v874 = vstv %s232
    %v875 = vmul.f32 %v688, %v874
    %v876 = vadd.f32 %v873, %v875
    %v877 = vstv %s238
    %v878 = vmul.f32 %v720, %v877
    %v879 = vadd.f32 %v876, %v878
    %v880 = vstv %s244
    %v881 = vmul.f32 %v752, %v880
    %v882 = vadd.f32 %v879, %v881
    %v883 = vstv %s250
    %v884 = vmul.f32 %v784, %v883
    %v885 = vadd.f32 %v882, %v884
    %v886 = vstv %s256
    %v887 = vadd.f32 %v885, %v886
    %v888 = vmax.f32 %v887, 0.0
    %v889 = vstv %s209
    %v890 = vmul.f32 %v560, %v889
    %v891 = vstv %s215
    %v892 = vmul.f32 %v592, %v891
    %v893 = vadd.f32 %v890, %v892
    %v894 = vstv %s221
    %v895 = vmul.f32 %v624, %v894
    %v896 = vadd.f32 %v893, %v895
    %v897 = vstv %s227
    %v898 = vmul.f32 %v656, %v897
    %v899 = vadd.f32 %v896, %v898
    %v900 = vstv %s233
    %v901 = vmul.f32 %v688, %v900
    %v902 = vadd.f32 %v899, %v901
    %v903 = vstv %s239
    %v904 = vmul.f32 %v720, %v903
    %v905 = vadd.f32 %v902, %v904
    %v906 = vstv %s245
    %v907 = vmul.f32 %v752, %v906
    %v908 = vadd.f32 %v905, %v907
    %v909 = vstv %s251
    %v910 = vmul.f32 %v784, %v909
    %v911 = vadd.f32 %v908, %v910
    %v912 = vstv %s257
    %v913 = vadd.f32 %v911, %v912
    %v914 = vmax.f32 %v913, 0.0
    %v915 = vstv %s210
    %v916 = vmul.f32 %v560, %v915
    %v917 = vstv %s216
    %v918 = vmul.f32 %v592, %v917
    %v919 = vadd.f32 %v916, %v918
    %v920 = vstv %s222
    %v921 = vmul.f32 %v624, %v920
    %v922 = vadd.f32 %v919, %v921
    %v923 = vstv %s228
    %v924 = vmul.f32 %v656, %v923
    %v925 = vadd.f32 %v922, %v924
    %v926 = vstv %s234
    %v927 = vmul.f32 %v688, %v926
    %v928 = vadd.f32 %v925, %v927
    %v929 = vstv %s240
    %v930 = vmul.f32 %v720, %v929
    %v931 = vadd.f32 %v928, %v930
    %v932 = vstv %s246
    %v933 = vmul.f32 %v752, %v932
    %v934 = vadd.f32 %v931, %v933
    %v935 = vstv %s252
    %v936 = vmul.f32 %v784, %v935
    %v937 = vadd.f32 %v934, %v936
    %v938 = vstv %s258
    %v939 = vadd.f32 %v937, %v938
    %v940 = vmax.f32 %v939, 0.0
    %v941 = vstv %s259
    %v942 = vmul.f32 %v810, %v941
    %v943 = vstv %s262
    %v944 = vmul.f32 %v836, %v943
    %v945 = vadd.f32 %v942, %v944
    %v946 = vstv %s265
    %v947 = vmul.f32 %v862, %v946
    %v948 = vadd.f32 %v945, %v947
    %v949 = vstv %s268
    %v950 = vmul.f32 %v888, %v949
    %v951 = vadd.f32 %v948, %v950
    %v952 = vstv %s271
    %v953 = vmul.f32 %v914, %v952
    %v954 = vadd.f32 %v951, %v953
    %v955 = vstv %s274
    %v956 = vmul.f32 %v940, %v955
    %v957 = vadd.f32 %v954, %v956
    %v958 = vstv %s277
    %v959 = vadd.f32 %v957, %v958
    %v960 = vstv %s260
    %v961 = vmul.f32 %v810, %v960
    %v962 = vstv %s263
    %v963 = vmul.f32 %v836, %v962
    %v964 = vadd.f32 %v961, %v963
    %v965 = vstv %s266
    %v966 = vmul.f32 %v862, %v965
    %v967 = vadd.f32 %v964, %v966
    %v968 = vstv %s269
    %v969 = vmul.f32 %v888, %v968
    %v970 = vadd.f32 %v967, %v969
    %v971 = vstv %s272
    %v972 = vmul.f32 %v914, %v971
    %v973 = vadd.f32 %v970, %v972
    %v974 = vstv %s275
    %v975 = vmul.f32 %v940, %v974
    %v976 = vadd.f32 %v973, %v975
    %v977 = vstv %s278
    %v978 = vadd.f32 %v976, %v977
    %v979 = vstv %s261
    %v980 = vmul.f32 %v810, %v979
    %v981 = vstv %s264
    %v982 = vmul.f32 %v836, %v981
    %v983 = vadd.f32 %v980, %v982
    %v984 = vstv %s267
    %v985 = vmul.f32 %v862, %v984
    %v986 = vadd.f32 %v983, %v985
    %v987 = vstv %s270
    %v988 = vmul.f32 %v888, %v987
    %v989 = vadd.f32 %v986, %v988
    %v990 = vstv %s273
    %v991 = vmul.f32 %v914, %v990
    %v992 = vadd.f32 %v989, %v991
    %v993 = vstv %s276
    %v994 = vmul.f32 %v940, %v993
    %v995 = vadd.f32 %v992, %v994
    %v996 = vstv %s279
    %v997 = vadd.f32 %v995, %v996
    %v998 = vmax.f32 %v959, %v978
    %v999 = vmax.f32 %v998, %v997
    %v1000 = vsub.f32 %v959, %v999
    %v1001 = vmul.f32 %v1000, 1.442695
    %v1002 = vpow.pop %v1001
    %v1003 = vsub.f32 %v978, %v999
    %v1004 = vmul.f32 %v1003, 1.442695
    %v1005 = vpow.pop %v1004
    %v1006 = vsub.f32 %v997, %v999
    %v1007 = vmul.f32 %v1006, 1.442695
    %v1008 = vpow.pop %v1007
    %v1009 = vadd.f32 %v1002, %v1005
    %v1010 = vadd.f32 %v1009, %v1008
    %v1011 = vrcp.pop %v1010
    %v1012 = vmul.f32 %v1002, %v1011
    %1013 = vst [vmem:[#allocation7] sm:$0xff] %v1012
    %v1014 = vmul.f32 %v1005, %v1011
    %s1015 = scalar_lea.vmem [#allocation7], %s281
    %1016 = vst [vmem:[%s1015] sm:$0xff] %v1014
    %v1017 = vmul.f32 %v1008, %v1011
    %s1018 = scalar_lea.vmem [#allocation7], %s284
    %1019 = vst [vmem:[%s1018] sm:$0xff] %v1017
    // Predicated region
    $region18: #{_forward_tiled.1} parent=1 // pred_check
      _
    $region19: #{_forward_tiled.1} parent=1 // pred_check_branch
      %1021 = sbr.rel (0) target = $region21
    $region20: #{_forward_tiled.1} parent=1 // pred_region
      %s1023 = ssub.s32 384, 384
      %1024 = vsyncadd [#allocation4], %s1023
      %s1025 = sshll.u32 [#allocation7], 4
      %s1026 = int_to_ptr.vmem [resolvable:$true] %s1025
      %1031 = dma.vmem_to_hbm [thread:$0]  %s1026, 384, %s2, [#allocation4], 128, 128, 8
    $region21: #{_forward_tiled.1} parent=1 // pred_fallthru
      _
    // Predicated region
    $region22: #{_forward_tiled.1} parent=1 // pred_check
      _
    $region23: #{_forward_tiled.1} parent=1 // pred_check_branch
      %1033 = sbr.rel (0) target = $region25
    $region24: #{_forward_tiled.1} parent=1 // pred_region
      %1034 = dma.done [#allocation4], 384
    $region25: #{_forward_tiled.1} parent=1 // pred_fallthru
      _
    %1035 = vsyncpa [#allocation3], 1
    %1036 = vsyncpa [#allocation4], 1
    %1037 = vsyncpa [#allocation5], 1

</llo_original>
